<compile_context>
chip_gen: v6e
topology: v6e:2x2x1
jax: 0.10.0
libtpu: 0.0.40
codegen_flags: <defaults>
</compile_context>

<pallas_src>
import functools

import jax
import jax.numpy as jnp
from jax.experimental import pallas as pl
from jax.experimental.pallas import tpu as pltpu


def _round_up(x, m):
    return (x + m - 1) // m * m


def _pick_pixel_tile(P, cap=1024):
    """Lane-dense pixel tile: multiple-of-128 divisor of P, capped for VMEM,
    and leaving >= 2 tiles when possible (pipelining / multi-TC sharding)."""
    if P % 128 != 0:
        # Odd spatial shape: single (lane-masked) tile per image; still correct.
        return P
    limit = min(cap, P)
    if P >= 2 * 128:
        limit = min(limit, P // 2)
    best = 128
    for t in range(128, limit + 1, 128):
        if P % t == 0:
            best = t
    return best


def _fused_kernel(x_ref, w1t_ref, b1_ref, w2bd_ref, b2_ref, o_ref, *, leaky_slope):
    """Fused convT1 + bias + leaky-where + convT2 + bias for one pixel tile.

    x_ref:    (Cin, TP)        input pixels (channels on sublanes, pixels on lanes)
    w1t_ref:  (32, Cin)        conv1 weight, row = s*8 + c_mid   (s = p*k1 + q)
    b1_ref:   (32, 1)
    w2bd_ref: (540, 32)        block-diag conv2 weight, row = (co,p,r,q,t), col = s*8 + c_mid
    b2_ref:   (540, 1)
    o_ref:    (540, TP)        row = co*36 + p*18 + r*6 + q*3 + t
    """
    # ---- conv1 on the MXU (K = 480) ----
    y1 = jnp.dot(w1t_ref[...], x_ref[...], preferred_element_type=jnp.float32)
    y1 = y1 + b1_ref[...]
    # fused torch.where(y > 0, y, 0.5 * y)
    y1 = jnp.where(y1 > 0, y1, y1 * leaky_slope)
    # ---- conv2 on the MXU via block-diagonal weight (K = 32) ----
    y2 = jnp.dot(w2bd_ref[...], y1, preferred_element_type=jnp.float32)
    o_ref[...] = y2 + b2_ref[...]


def fused_double_conv_transpose(x, w1, b1, w2, b2, *, leaky_slope=0.5):
    """ConvT(Cin->Cmid,k1,s=k1) -> where(y>0,y,0.5y) -> ConvT(Cmid->Cout,k2,s=k2)."""
    N, Cin, H, W = x.shape
    Cin_, Cmid, k1, k1b = w1.shape
    Cmid_, Cout, k2, k2b = w2.shape
    assert Cin == Cin_ and Cmid == Cmid_ and k1 == k1b and k2 == k2b

    P = H * W
    n_sub = k1 * k1                        # conv1 sub-positions per input pixel (4)
    c_mid_pad = _round_up(Cmid, 8)         # 7 -> 8 (sublane-aligned groups)
    rows1 = n_sub * c_mid_pad              # 32
    rows_out = Cout * n_sub * k2 * k2      # 540 conv2 outputs per input pixel

    # ---- pack weights/biases (tiny, traced once under jit) ----
    # conv1: rows ordered (s = p*k1 + q, c_mid), contraction dim Cin on lanes.
    w1t = jnp.transpose(w1, (2, 3, 1, 0)).reshape(n_sub, Cmid, Cin)
    w1t = jnp.pad(w1t, ((0, 0), (0, c_mid_pad - Cmid), (0, 0))).reshape(rows1, Cin)
    b1c = jnp.pad(jnp.broadcast_to(b1[None, :], (n_sub, Cmid)),
                  ((0, 0), (0, c_mid_pad - Cmid))).reshape(rows1, 1)

    # conv2 as a block-diagonal matrix over the conv1 sub-positions:
    #   w2bd[(co,p,r,q,t), s*8 + c] = w2[c, co, r, t] * (s == p*k1 + q)
    w2_perm = jnp.transpose(w2, (1, 2, 3, 0))                       # (Cout, k2, k2, Cmid)
    w2_perm = jnp.pad(w2_perm, ((0, 0), (0, 0), (0, 0), (0, c_mid_pad - Cmid)))
    eye4 = jnp.eye(n_sub, dtype=w2.dtype).reshape(k1, k1, n_sub)    # (p, q, s)
    w2bd = jnp.einsum('ortc,pqs->oprqtsc', w2_perm, eye4)
    w2bd = w2bd.reshape(rows_out, rows1)                            # (540, 32)
    b2c = jnp.repeat(b2, n_sub * k2 * k2).reshape(rows_out, 1)      # row -> b2[co]

    # NCHW kept as-is: a free reshape, no XLA transpose before the kernel.
    x_cp = x.reshape(N, Cin, P)

    TP = _pick_pixel_tile(P)               # 128 for 16x16 -> grid (N, 2)
    grid = (N, pl.cdiv(P, TP))

    kernel = functools.partial(_fused_kernel, leaky_slope=leaky_slope)

    out = pl.pallas_call(
        kernel,
        out_shape=jax.ShapeDtypeStruct((N, rows_out, P), jnp.float32),
        grid_spec=pltpu.PrefetchScalarGridSpec(
            num_scalar_prefetch=0,
            grid=grid,
            in_specs=[
                pl.BlockSpec((None, Cin, TP), lambda n, j: (n, 0, j)),
                pl.BlockSpec((rows1, Cin), lambda n, j: (0, 0)),
                pl.BlockSpec((rows1, 1), lambda n, j: (0, 0)),
                pl.BlockSpec((rows_out, rows1), lambda n, j: (0, 0)),
                pl.BlockSpec((rows_out, 1), lambda n, j: (0, 0)),
            ],
            out_specs=pl.BlockSpec((None, rows_out, TP), lambda n, j: (n, 0, j)),
        ),
        compiler_params=pltpu.CompilerParams(
            dimension_semantics=("parallel", "parallel")),
    )(x_cp, w1t, b1c, w2bd, b2c)

    # Single fused reshape+transpose (no slice: rows_out == 540 exactly) scatters
    # the per-pixel (k1*k2)^2 blocks back to NCHW:
    #   out[n, co, (h*k1+p)*k2+r, (w*k1+q)*k2+t]
    out = out.reshape(N, Cout, k1, k2, k1, k2, H, W)     # (n, co, p, r, q, t, h, w)
    out = jnp.transpose(out, (0, 1, 6, 2, 3, 7, 4, 5))   # (n, co, h, p, r, w, q, t)
    return out.reshape(N, Cout, H * k1 * k2, W * k1 * k2)


model_forward = jax.jit(fused_double_conv_transpose)


# ------------------------- pure-JAX reference ---------------------------------
def _ref_convt_stride_eq_k(x, w, b, k):
    # ConvTranspose2d with stride == kernel_size, padding 0.
    N, Ci, H, W = x.shape
    Co = w.shape[1]
    y = jnp.einsum('nihw,iopq->nohpwq', x, w)
    y = y.reshape(N, Co, H * k, W * k)
    return y + b[None, :, None, None]


def _reference_forward(x, w1, b1, w2, b2):
    y = _ref_convt_stride_eq_k(x, w1, b1, 2)
    y = jnp.where(y > 0, y, y * 0.5)
    return _ref_convt_stride_eq_k(y, w2, b2, 3)


if __name__ == "__main__":
    key = jax.random.PRNGKey(0)
    kx, k1, k2, k3, k4 = jax.random.split(key, 5)

    # Channels are fixed by the module (480 -> 7 -> 15); small batch/spatial.
    x1 = jax.random.normal(kx, (2, 480, 16, 16), jnp.float32)
    w1 = jax.random.uniform(k1, (480, 7, 2, 2), jnp.float32, -0.022, 0.022)
    b1 = jax.random.uniform(k2, (7,), jnp.float32, -0.022, 0.022)
    w2 = jax.random.uniform(k3, (7, 15, 3, 3), jnp.float32, -0.12, 0.12)
    b2 = jax.random.uniform(k4, (15,), jnp.float32, -0.12, 0.12)

    out = model_forward(x1, w1, b1, w2, b2)
    jax.block_until_ready(out)
    assert out.shape == (2, 15, 96, 96), out.shape

    ref = _reference_forward(x1, w1, b1, w2, b2)
    max_err = float(jnp.max(jnp.abs(out - ref)))
    assert max_err < 1e-3, f"max abs error {max_err}"

    print("KERNEL_OK")
</pallas_src>

<mosaic_0001>
module attributes {stable_mosaic.version = 11 : i64} {
  func.func @_fused_kernel(%arg0: i32, %arg1: i32, %arg2: memref<1x480x128xf32, #tpu.memory_space<vmem>>, %arg3: memref<32x480xf32, #tpu.memory_space<vmem>>, %arg4: memref<32x1xf32, #tpu.memory_space<vmem>>, %arg5: memref<540x32xf32, #tpu.memory_space<vmem>>, %arg6: memref<540x1xf32, #tpu.memory_space<vmem>>, %arg7: memref<1x540x128xf32, #tpu.memory_space<vmem>>) attributes {dimension_semantics = [#tpu.dimension_semantics<parallel>, #tpu.dimension_semantics<parallel>], iteration_bounds = array<i64: 2, 2>, scalar_prefetch = 0 : i64, scratch_operands = 0 : i64, tpu.core_type = #tpu.core_type<tc>, window_params = [{transform_indices = @transform_0, window_bounds = array<i64: 1, 480, 128>}, {pipeline_mode = #tpu.pipeline_mode<synchronous>, transform_indices = @transform_1, window_bounds = array<i64: 32, 480>}, {pipeline_mode = #tpu.pipeline_mode<synchronous>, transform_indices = @transform_2, window_bounds = array<i64: 32, 1>}, {pipeline_mode = #tpu.pipeline_mode<synchronous>, transform_indices = @transform_3, window_bounds = array<i64: 540, 32>}, {pipeline_mode = #tpu.pipeline_mode<synchronous>, transform_indices = @transform_4, window_bounds = array<i64: 540, 1>}, {transform_indices = @transform_5, window_bounds = array<i64: 1, 540, 128>}]} {
    %c0 = arith.constant 0 : index
    %c0_0 = arith.constant 0 : index
    %0 = vector.load %arg3[%c0, %c0_0] : memref<32x480xf32, #tpu.memory_space<vmem>>, vector<32x480xf32>
    %c0_1 = arith.constant 0 : index
    %c0_2 = arith.constant 0 : index
    %c0_3 = arith.constant 0 : index
    %1 = vector.load %arg2[%c0_1, %c0_2, %c0_3] : memref<1x480x128xf32, #tpu.memory_space<vmem>>, vector<1x480x128xf32>
    %2 = vector.shape_cast %1 : vector<1x480x128xf32> to vector<480x128xf32>
    %cst = arith.constant dense<0.000000e+00> : vector<32x128xf32>
    %3 = tpu.matmul %0, %2, %cst {dimension_numbers = #tpu.dot_dimension_numbers<[1], [0], [0], [1], [0, 0, 1, 1], [], []>} : vector<32x480xf32>, vector<480x128xf32>, vector<32x128xf32> -> vector<32x128xf32>
    %c0_4 = arith.constant 0 : index
    %c0_5 = arith.constant 0 : index
    %4 = vector.load %arg4[%c0_4, %c0_5] : memref<32x1xf32, #tpu.memory_space<vmem>>, vector<32x1xf32>
    %5 = vector.broadcast %4 : vector<32x1xf32> to vector<32x128xf32>
    %6 = arith.addf %3, %5 : vector<32x128xf32>
    %cst_6 = arith.constant 0.000000e+00 : f32
    %7 = vector.broadcast %cst_6 : f32 to vector<32x128xf32>
    %8 = arith.cmpf ogt, %6, %7 : vector<32x128xf32>
    %cst_7 = arith.constant 5.000000e-01 : f32
    %9 = vector.broadcast %cst_7 : f32 to vector<32x128xf32>
    %10 = arith.mulf %6, %9 : vector<32x128xf32>
    %11 = arith.select %8, %6, %10 : vector<32x128xi1>, vector<32x128xf32>
    %c0_8 = arith.constant 0 : index
    %c0_9 = arith.constant 0 : index
    %12 = vector.load %arg5[%c0_8, %c0_9] : memref<540x32xf32, #tpu.memory_space<vmem>>, vector<540x32xf32>
    %cst_10 = arith.constant dense<0.000000e+00> : vector<540x128xf32>
    %13 = tpu.matmul %12, %11, %cst_10 {dimension_numbers = #tpu.dot_dimension_numbers<[1], [0], [0], [1], [0, 0, 1, 1], [], []>} : vector<540x32xf32>, vector<32x128xf32>, vector<540x128xf32> -> vector<540x128xf32>
    %c0_11 = arith.constant 0 : index
    %c0_12 = arith.constant 0 : index
    %14 = vector.load %arg6[%c0_11, %c0_12] : memref<540x1xf32, #tpu.memory_space<vmem>>, vector<540x1xf32>
    %15 = vector.broadcast %14 : vector<540x1xf32> to vector<540x128xf32>
    %16 = arith.addf %13, %15 : vector<540x128xf32>
    %c0_13 = arith.constant 0 : index
    %c0_14 = arith.constant 0 : index
    %c0_15 = arith.constant 0 : index
    %17 = vector.load %arg7[%c0_13, %c0_14, %c0_15] : memref<1x540x128xf32, #tpu.memory_space<vmem>>, vector<1x540x128xf32>
    %18 = vector.shape_cast %17 : vector<1x540x128xf32> to vector<540x128xf32>
    %19 = vector.shape_cast %16 : vector<540x128xf32> to vector<1x540x128xf32>
    tpu.vector_store %arg7[%c0_13, %c0_14, %c0_15], %19 {strides = array<i32>} : memref<1x540x128xf32, #tpu.memory_space<vmem>>, vector<1x540x128xf32>,
    return
  }
  func.func @transform_0(%arg0: i32, %arg1: i32) -> (i32, i32, i32) {
    %c0_i32 = arith.constant 0 : i32
    %c0_i32_0 = arith.constant 0 : i32
    return %arg0, %c0_i32, %arg1 : i32, i32, i32
  }
  func.func @transform_1(%arg0: i32, %arg1: i32) -> (i32, i32) {
    %c0_i32 = arith.constant 0 : i32
    %c0_i32_0 = arith.constant 0 : i32
    %c0_i32_1 = arith.constant 0 : i32
    return %c0_i32, %c0_i32_0 : i32, i32
  }
  func.func @transform_2(%arg0: i32, %arg1: i32) -> (i32, i32) {
    %c0_i32 = arith.constant 0 : i32
    %c0_i32_0 = arith.constant 0 : i32
    %c0_i32_1 = arith.constant 0 : i32
    return %c0_i32, %c0_i32_0 : i32, i32
  }
  func.func @transform_3(%arg0: i32, %arg1: i32) -> (i32, i32) {
    %c0_i32 = arith.constant 0 : i32
    %c0_i32_0 = arith.constant 0 : i32
    %c0_i32_1 = arith.constant 0 : i32
    return %c0_i32, %c0_i32_0 : i32, i32
  }
  func.func @transform_4(%arg0: i32, %arg1: i32) -> (i32, i32) {
    %c0_i32 = arith.constant 0 : i32
    %c0_i32_0 = arith.constant 0 : i32
    %c0_i32_1 = arith.constant 0 : i32
    return %c0_i32, %c0_i32_0 : i32, i32
  }
  func.func @transform_5(%arg0: i32, %arg1: i32) -> (i32, i32, i32) {
    %c0_i32 = arith.constant 0 : i32
    %c0_i32_0 = arith.constant 0 : i32
    return %arg0, %c0_i32, %arg1 : i32, i32, i32
  }
}

</mosaic_0001>

<llo_original>
// kernel: fused_double_conv_transpose.1
$region0: #{fused_double_conv_transpose.1}
  #allocation0 [shape = 'u32[]', space=smem, size = 0x4, offset = 0x4, fixed_abs, tag = 'smem constant byte address 0x4 - core index']
  #allocation1 [shape = 'u32[144,128]{1,0:T(1,128)}', space=vmem, size = 0x12000, scoped, tag = 'internal scratch']
  %s0 = inlined_call_operand.vmem [shape: f32[2,480,256], index: 0, kind: input, shape index: {}]
  %s1 = inlined_call_operand.vmem [shape: f32[32,480], index: 1, kind: input, shape index: {}]
  %s2 = inlined_call_operand.vmem [shape: f32[32,1], index: 2, kind: input, shape index: {}]
  %s3 = inlined_call_operand.vmem [shape: f32[540,32], index: 3, kind: input, shape index: {}]
  %s4 = inlined_call_operand.vmem [shape: f32[540,1], index: 4, kind: input, shape index: {}]
  %s5 = inlined_call_operand.vmem [shape: f32[2,540,256], index: 5, kind: output, shape index: {}]
  %s6 = sld [smem:[#allocation0]]
  $region125: #{fused_double_conv_transpose.1} parent=0
    _
  %s8 = ssub.s32 1, %s6
  %s9 = scalar_select 0, %s8, %s6
  $region1: #{fused_double_conv_transpose.1} parent=0
    #allocation2 [shape = 'u8[491520]{0}', space=vmem, size = 0x78000, scoped, tag = 'input window, operand 0']
    #allocation3 [shape = 'u8[557056]{0}', space=vmem, size = 0x88000, scoped, tag = 'output window, operand 0']
    loop: start=0, step=1, limit=6
    $region2: #{fused_double_conv_transpose.1} parent=1 // loop_pre_header
      _
    $region3: #{fused_double_conv_transpose.1} parent=1 // loop_header
      %s11 = sphi 0, %s15
      %p12 = scmp.ge.s32.totalorder %s11, 6
      %s18 = sphi 0, %s30
      %s19 = sphi 0, %s26
      %s20 = sphi 0, %s18
      %s21 = sphi 0, %s19
      %s22 = sphi 0, %s20
      %s23 = sphi 0, %s21
      %s35 = sphi 0, %s37
      %s38 = sphi 0, %s35
      %s39 = sphi 0, %s38
      %s55 = sphi 0, %s39
      %s59 = sphi 0, %s59
      %s61 = sphi 0, %s59
      %s62 = sphi 0, %s61
      %s76 = sphi 0, %s62
      %s80 = sphi 0, %s80
      %s82 = sphi 0, %s80
      %s83 = sphi 0, %s82
      %s97 = sphi 0, %s83
      %s101 = sphi 0, %s101
      %s103 = sphi 0, %s101
      %s104 = sphi 0, %s103
      %s118 = sphi 0, %s104
      %s122 = sphi 0, %s122
      %s124 = sphi 0, %s122
      %s125 = sphi 0, %s124
      %s139 = sphi 0, %s125
      %s147 = sphi 0, %s149
      %s150 = sphi 0, %s147
      %s151 = sphi 0, %s150
      %s167 = sphi 0, %s151
    $region4: #{fused_double_conv_transpose.1} parent=1 // loop_header_branch
      %14 = sbr.rel (%p12) target = $region8
    $region5: #{fused_double_conv_transpose.1} parent=1 // loop_body
      %s16 = ssub.s32 %s11, 1
      %s17 = ssub.s32 %s11, 2
      %s24 = sadd.s32 1, %s19
      %p25 = scmp.ge.s32.totalorder %s24, 2
      %s26 = scalar_select %p25, 0, %s24
      %s27 = sadd.s32 1, %s18
      %s28 = scalar_select %p25, %s27, %s18
      %p29 = scmp.ge.s32.totalorder %s28, 2
      %s30 = scalar_select %p29, 0, %s28
      %s31 = ssub.s32 %s18, %s30
      %s32 = ssub.s32 %s19, %s26
      %s33 = sor.u32 %s31, %s32
      %p34 = scmp.eq.s32.totalorder %s33, 0
      %s36 = sadd.s32 %s35, 1
      %s37 = scalar_select %p34, %s35, %s36
      %p40 = pneg %p34
      %p41 = scmp.eq.s32.totalorder %s11, 3
      %p42 = por %p40, %p41
      %p43 = scmp.ne.s32.totalorder %s35, %s38
      %p44 = scmp.eq.s32.totalorder %s11, 0
      %p45 = por %p43, %p44
      %p46 = scmp.ne.s32.totalorder %s35, %s38
      %p47 = scmp.eq.s32.totalorder %s16, 3
      %p48 = por %p46, %p47
      %p49 = scmp.ne.s32.totalorder %s38, %s39
      %p50 = scmp.eq.s32.totalorder %s16, 0
      %p51 = por %p49, %p50
      %p52 = scmp.ne.s32.totalorder %s38, %s39
      %p53 = scmp.eq.s32.totalorder %s17, 3
      %p54 = por %p52, %p53
      %p56 = scmp.ne.s32.totalorder %s39, %s55
      %p57 = scmp.eq.s32.totalorder %s17, 0
      %p58 = por %p56, %p57
      %s60 = sadd.s32 %s59, 1
      %p63 = scmp.eq.s32.totalorder %s11, 3
      %p64 = scmp.ne.s32.totalorder %s59, %s61
      %p65 = scmp.eq.s32.totalorder %s11, 0
      %p66 = por %p64, %p65
      %p67 = scmp.ne.s32.totalorder %s59, %s61
      %p68 = scmp.eq.s32.totalorder %s16, 3
      %p69 = por %p67, %p68
      %p70 = scmp.ne.s32.totalorder %s61, %s62
      %p71 = scmp.eq.s32.totalorder %s16, 0
      %p72 = por %p70, %p71
      %p73 = scmp.ne.s32.totalorder %s61, %s62
      %p74 = scmp.eq.s32.totalorder %s17, 3
      %p75 = por %p73, %p74
      %p77 = scmp.ne.s32.totalorder %s62, %s76
      %p78 = scmp.eq.s32.totalorder %s17, 0
      %p79 = por %p77, %p78
      %s81 = sadd.s32 %s80, 1
      %p84 = scmp.eq.s32.totalorder %s11, 3
      %p85 = scmp.ne.s32.totalorder %s80, %s82
      %p86 = scmp.eq.s32.totalorder %s11, 0
      %p87 = por %p85, %p86
      %p88 = scmp.ne.s32.totalorder %s80, %s82
      %p89 = scmp.eq.s32.totalorder %s16, 3
      %p90 = por %p88, %p89
      %p91 = scmp.ne.s32.totalorder %s82, %s83
      %p92 = scmp.eq.s32.totalorder %s16, 0
      %p93 = por %p91, %p92
      %p94 = scmp.ne.s32.totalorder %s82, %s83
      %p95 = scmp.eq.s32.totalorder %s17, 3
      %p96 = por %p94, %p95
      %p98 = scmp.ne.s32.totalorder %s83, %s97
      %p99 = scmp.eq.s32.totalorder %s17, 0
      %p100 = por %p98, %p99
      %s102 = sadd.s32 %s101, 1
      %p105 = scmp.eq.s32.totalorder %s11, 3
      %p106 = scmp.ne.s32.totalorder %s101, %s103
      %p107 = scmp.eq.s32.totalorder %s11, 0
      %p108 = por %p106, %p107
      %p109 = scmp.ne.s32.totalorder %s101, %s103
      %p110 = scmp.eq.s32.totalorder %s16, 3
      %p111 = por %p109, %p110
      %p112 = scmp.ne.s32.totalorder %s103, %s104
      %p113 = scmp.eq.s32.totalorder %s16, 0
      %p114 = por %p112, %p113
      %p115 = scmp.ne.s32.totalorder %s103, %s104
      %p116 = scmp.eq.s32.totalorder %s17, 3
      %p117 = por %p115, %p116
      %p119 = scmp.ne.s32.totalorder %s104, %s118
      %p120 = scmp.eq.s32.totalorder %s17, 0
      %p121 = por %p119, %p120
      %s123 = sadd.s32 %s122, 1
      %p126 = scmp.eq.s32.totalorder %s11, 3
      %p127 = scmp.ne.s32.totalorder %s122, %s124
      %p128 = scmp.eq.s32.totalorder %s11, 0
      %p129 = por %p127, %p128
      %p130 = scmp.ne.s32.totalorder %s122, %s124
      %p131 = scmp.eq.s32.totalorder %s16, 3
      %p132 = por %p130, %p131
      %p133 = scmp.ne.s32.totalorder %s124, %s125
      %p134 = scmp.eq.s32.totalorder %s16, 0
      %p135 = por %p133, %p134
      %p136 = scmp.ne.s32.totalorder %s124, %s125
      %p137 = scmp.eq.s32.totalorder %s17, 3
      %p138 = por %p136, %p137
      %p140 = scmp.ne.s32.totalorder %s125, %s139
      %p141 = scmp.eq.s32.totalorder %s17, 0
      %p142 = por %p140, %p141
      %s143 = ssub.s32 %s18, %s30
      %s144 = ssub.s32 %s19, %s26
      %s145 = sor.u32 %s143, %s144
      %p146 = scmp.eq.s32.totalorder %s145, 0
      %s148 = sadd.s32 %s147, 1
      %s149 = scalar_select %p146, %s147, %s148
      %p152 = pneg %p146
      %p153 = scmp.eq.s32.totalorder %s11, 3
      %p154 = por %p152, %p153
      %p155 = scmp.ne.s32.totalorder %s147, %s150
      %p156 = scmp.eq.s32.totalorder %s11, 0
      %p157 = por %p155, %p156
      %p158 = scmp.ne.s32.totalorder %s147, %s150
      %p159 = scmp.eq.s32.totalorder %s16, 3
      %p160 = por %p158, %p159
      %p161 = scmp.ne.s32.totalorder %s150, %s151
      %p162 = scmp.eq.s32.totalorder %s16, 0
      %p163 = por %p161, %p162
      %p164 = scmp.ne.s32.totalorder %s150, %s151
      %p165 = scmp.eq.s32.totalorder %s17, 3
      %p166 = por %p164, %p165
      %p168 = scmp.ne.s32.totalorder %s151, %s167
      %p169 = scmp.eq.s32.totalorder %s17, 0
      %p170 = por %p168, %p169
      %p171 = scmp.le.s32.totalorder 1, %s11
      %p172 = scmp.lt.s32.totalorder %s11, 5
      %p173 = pnand %p171, %p172
      %p174 = pneg %p173
      // Predicated region
      $region9: #{fused_double_conv_transpose.1} parent=5 // pred_check
        _
      $region10: #{fused_double_conv_transpose.1} parent=5 // pred_check_branch
        %176 = sbr.rel (%p173) target = $region12
      $region11: #{fused_double_conv_transpose.1} parent=5 // pred_region
        %s177 = ssub.s32 %s11, 1
        // Predicated region
        $region13: #{fused_double_conv_transpose.1} parent=11 // pred_check
          %p178 = pneg %p72
        $region14: #{fused_double_conv_transpose.1} parent=11 // pred_check_branch
          %180 = sbr.rel (%p178) target = $region16
        $region15: #{fused_double_conv_transpose.1} parent=11 // pred_region
          _
        $region16: #{fused_double_conv_transpose.1} parent=11 // pred_fallthru
          _
        // Predicated region
        $region17: #{fused_double_conv_transpose.1} parent=11 // pred_check
          %p181 = pneg %p93
        $region18: #{fused_double_conv_transpose.1} parent=11 // pred_check_branch
          %183 = sbr.rel (%p181) target = $region20
        $region19: #{fused_double_conv_transpose.1} parent=11 // pred_region
          _
        $region20: #{fused_double_conv_transpose.1} parent=11 // pred_fallthru
          _
        // Predicated region
        $region21: #{fused_double_conv_transpose.1} parent=11 // pred_check
          %p184 = pneg %p114
        $region22: #{fused_double_conv_transpose.1} parent=11 // pred_check_branch
          %186 = sbr.rel (%p184) target = $region24
        $region23: #{fused_double_conv_transpose.1} parent=11 // pred_region
          _
        $region24: #{fused_double_conv_transpose.1} parent=11 // pred_fallthru
          _
        // Predicated region
        $region25: #{fused_double_conv_transpose.1} parent=11 // pred_check
          %p187 = pneg %p135
        $region26: #{fused_double_conv_transpose.1} parent=11 // pred_check_branch
          %189 = sbr.rel (%p187) target = $region28
        $region27: #{fused_double_conv_transpose.1} parent=11 // pred_region
          _
        $region28: #{fused_double_conv_transpose.1} parent=11 // pred_fallthru
          _
      $region12: #{fused_double_conv_transpose.1} parent=5 // pred_fallthru
        _
      %p190 = scmp.lt.s32.totalorder %s11, 4
      // Predicated region
      $region29: #{fused_double_conv_transpose.1} parent=5 // pred_check
        %p191 = pneg %p190
      $region30: #{fused_double_conv_transpose.1} parent=5 // pred_check_branch
        %193 = sbr.rel (%p191) target = $region32
      $region31: #{fused_double_conv_transpose.1} parent=5 // pred_region
        // Predicated region
        $region33: #{fused_double_conv_transpose.1} parent=31 // pred_check
          %p194 = pneg %p45
        $region34: #{fused_double_conv_transpose.1} parent=31 // pred_check_branch
          %196 = sbr.rel (%p194) target = $region36
        $region35: #{fused_double_conv_transpose.1} parent=31 // pred_region
          %s197 = sand.u32 %s35, 1
          %s198 = sand.u32 %s35, 1
          %s199 = smul.addr %s198, 480
          %s200 = scalar_lea.vmem [#allocation2], %s199
          %s201 = smul.addr %s18, 120
          %s202 = sadd.s32 %s19, %s201
          %s203 = smul.addr %s202, 8
          %s204 = scalar_lea.vmem %s0, %s203
          // Predicated region
          $region37: #{fused_double_conv_transpose.1} parent=35 // pred_check
            _
          $region38: #{fused_double_conv_transpose.1} parent=35 // pred_check_branch
            %206 = sbr.rel (0) target = $region40
          $region39: #{fused_double_conv_transpose.1} parent=35 // pred_region
            // Predicated region
            $region41: #{fused_double_conv_transpose.1} parent=39 // pred_check
              _
            $region42: #{fused_double_conv_transpose.1} parent=39 // pred_check_branch
              %208 = sbr.rel (0) target = $region44
            $region43: #{fused_double_conv_transpose.1} parent=39 // pred_region
              // Predicated region
              $region56: #{fused_double_conv_transpose.1} parent=43 // pred_check
                _
              $region57: #{fused_double_conv_transpose.1} parent=43 // pred_check_branch
                %342 = sbr.rel (0) target = $region59
              $region58: #{fused_double_conv_transpose.1} parent=43 // pred_region
                loop: start=0, step=1, limit=1
                $region60: #{fused_double_conv_transpose.1} parent=58 // loop_pre_header
                  _
                $region61: #{fused_double_conv_transpose.1} parent=58 // loop_header
                  %s344 = sphi 0, %s348
                  %p345 = scmp.ge.s32.totalorder %s344, 1
                  %s349 = sphi %s204, %s204
                  %s350 = sphi %s200, %s200
                $region62: #{fused_double_conv_transpose.1} parent=58 // loop_header_branch
                  %347 = sbr.rel (%p345) target = $region66
                $region63: #{fused_double_conv_transpose.1} parent=58 // loop_body
                  %v351 = vld [vmem:[%s349] sm:$0xff]
                  %352 = vst [vmem:[%s350] sm:$0xff] %v351
                  %v353 = vld [vmem:[%s349 + $0x10] sm:$0xff]
                  %354 = vst [vmem:[%s350 + $0x8] sm:$0xff] %v353
                  %v355 = vld [vmem:[%s349 + $0x20] sm:$0xff]
                  %356 = vst [vmem:[%s350 + $0x10] sm:$0xff] %v355
                  %v357 = vld [vmem:[%s349 + $0x30] sm:$0xff]
                  %358 = vst [vmem:[%s350 + $0x18] sm:$0xff] %v357
                  %v359 = vld [vmem:[%s349 + $0x40] sm:$0xff]
                  %360 = vst [vmem:[%s350 + $0x20] sm:$0xff] %v359
                  %v361 = vld [vmem:[%s349 + $0x50] sm:$0xff]
                  %362 = vst [vmem:[%s350 + $0x28] sm:$0xff] %v361
                  %v363 = vld [vmem:[%s349 + $0x60] sm:$0xff]
                  %364 = vst [vmem:[%s350 + $0x30] sm:$0xff] %v363
                  %v365 = vld [vmem:[%s349 + $0x70] sm:$0xff]
                  %366 = vst [vmem:[%s350 + $0x38] sm:$0xff] %v365
                  %v367 = vld [vmem:[%s349 + $0x80] sm:$0xff]
                  %368 = vst [vmem:[%s350 + $0x40] sm:$0xff] %v367
                  %v369 = vld [vmem:[%s349 + $0x90] sm:$0xff]
                  %370 = vst [vmem:[%s350 + $0x48] sm:$0xff] %v369
                  %v371 = vld [vmem:[%s349 + $0xa0] sm:$0xff]
                  %372 = vst [vmem:[%s350 + $0x50] sm:$0xff] %v371
                  %v373 = vld [vmem:[%s349 + $0xb0] sm:$0xff]
                  %374 = vst [vmem:[%s350 + $0x58] sm:$0xff] %v373
                  %v375 = vld [vmem:[%s349 + $0xc0] sm:$0xff]
                  %376 = vst [vmem:[%s350 + $0x60] sm:$0xff] %v375
                  %v377 = vld [vmem:[%s349 + $0xd0] sm:$0xff]
                  %378 = vst [vmem:[%s350 + $0x68] sm:$0xff] %v377
                  %v379 = vld [vmem:[%s349 + $0xe0] sm:$0xff]
                  %380 = vst [vmem:[%s350 + $0x70] sm:$0xff] %v379
                  %v381 = vld [vmem:[%s349 + $0xf0] sm:$0xff]
                  %382 = vst [vmem:[%s350 + $0x78] sm:$0xff] %v381
                  %v383 = vld [vmem:[%s349 + $0x100] sm:$0xff]
                  %384 = vst [vmem:[%s350 + $0x80] sm:$0xff] %v383
                  %v385 = vld [vmem:[%s349 + $0x110] sm:$0xff]
                  %386 = vst [vmem:[%s350 + $0x88] sm:$0xff] %v385
                  %v387 = vld [vmem:[%s349 + $0x120] sm:$0xff]
                  %388 = vst [vmem:[%s350 + $0x90] sm:$0xff] %v387
                  %v389 = vld [vmem:[%s349 + $0x130] sm:$0xff]
                  %390 = vst [vmem:[%s350 + $0x98] sm:$0xff] %v389
                  %v391 = vld [vmem:[%s349 + $0x140] sm:$0xff]
                  %392 = vst [vmem:[%s350 + $0xa0] sm:$0xff] %v391
                  %v393 = vld [vmem:[%s349 + $0x150] sm:$0xff]
                  %394 = vst [vmem:[%s350 + $0xa8] sm:$0xff] %v393
                  %v395 = vld [vmem:[%s349 + $0x160] sm:$0xff]
                  %396 = vst [vmem:[%s350 + $0xb0] sm:$0xff] %v395
                  %v397 = vld [vmem:[%s349 + $0x170] sm:$0xff]
                  %398 = vst [vmem:[%s350 + $0xb8] sm:$0xff] %v397
                  %v399 = vld [vmem:[%s349 + $0x180] sm:$0xff]
                  %400 = vst [vmem:[%s350 + $0xc0] sm:$0xff] %v399
                  %v401 = vld [vmem:[%s349 + $0x190] sm:$0xff]
                  %402 = vst [vmem:[%s350 + $0xc8] sm:$0xff] %v401
                  %v403 = vld [vmem:[%s349 + $0x1a0] sm:$0xff]
                  %404 = vst [vmem:[%s350 + $0xd0] sm:$0xff] %v403
                  %v405 = vld [vmem:[%s349 + $0x1b0] sm:$0xff]
                  %406 = vst [vmem:[%s350 + $0xd8] sm:$0xff] %v405
                  %v407 = vld [vmem:[%s349 + $0x1c0] sm:$0xff]
                  %408 = vst [vmem:[%s350 + $0xe0] sm:$0xff] %v407
                  %v409 = vld [vmem:[%s349 + $0x1d0] sm:$0xff]
                  %410 = vst [vmem:[%s350 + $0xe8] sm:$0xff] %v409
                  %v411 = vld [vmem:[%s349 + $0x1e0] sm:$0xff]
                  %412 = vst [vmem:[%s350 + $0xf0] sm:$0xff] %v411
                  %v413 = vld [vmem:[%s349 + $0x1f0] sm:$0xff]
                  %414 = vst [vmem:[%s350 + $0xf8] sm:$0xff] %v413
                  %v415 = vld [vmem:[%s349 + $0x200] sm:$0xff]
                  %416 = vst [vmem:[%s350 + $0x100] sm:$0xff] %v415
                  %v417 = vld [vmem:[%s349 + $0x210] sm:$0xff]
                  %418 = vst [vmem:[%s350 + $0x108] sm:$0xff] %v417
                  %v419 = vld [vmem:[%s349 + $0x220] sm:$0xff]
                  %420 = vst [vmem:[%s350 + $0x110] sm:$0xff] %v419
                  %v421 = vld [vmem:[%s349 + $0x230] sm:$0xff]
                  %422 = vst [vmem:[%s350 + $0x118] sm:$0xff] %v421
                  %v423 = vld [vmem:[%s349 + $0x240] sm:$0xff]
                  %424 = vst [vmem:[%s350 + $0x120] sm:$0xff] %v423
                  %v425 = vld [vmem:[%s349 + $0x250] sm:$0xff]
                  %426 = vst [vmem:[%s350 + $0x128] sm:$0xff] %v425
                  %v427 = vld [vmem:[%s349 + $0x260] sm:$0xff]
                  %428 = vst [vmem:[%s350 + $0x130] sm:$0xff] %v427
                  %v429 = vld [vmem:[%s349 + $0x270] sm:$0xff]
                  %430 = vst [vmem:[%s350 + $0x138] sm:$0xff] %v429
                  %v431 = vld [vmem:[%s349 + $0x280] sm:$0xff]
                  %432 = vst [vmem:[%s350 + $0x140] sm:$0xff] %v431
                  %v433 = vld [vmem:[%s349 + $0x290] sm:$0xff]
                  %434 = vst [vmem:[%s350 + $0x148] sm:$0xff] %v433
                  %v435 = vld [vmem:[%s349 + $0x2a0] sm:$0xff]
                  %436 = vst [vmem:[%s350 + $0x150] sm:$0xff] %v435
                  %v437 = vld [vmem:[%s349 + $0x2b0] sm:$0xff]
                  %438 = vst [vmem:[%s350 + $0x158] sm:$0xff] %v437
                  %v439 = vld [vmem:[%s349 + $0x2c0] sm:$0xff]
                  %440 = vst [vmem:[%s350 + $0x160] sm:$0xff] %v439
                  %v441 = vld [vmem:[%s349 + $0x2d0] sm:$0xff]
                  %442 = vst [vmem:[%s350 + $0x168] sm:$0xff] %v441
                  %v443 = vld [vmem:[%s349 + $0x2e0] sm:$0xff]
                  %444 = vst [vmem:[%s350 + $0x170] sm:$0xff] %v443
                  %v445 = vld [vmem:[%s349 + $0x2f0] sm:$0xff]
                  %446 = vst [vmem:[%s350 + $0x178] sm:$0xff] %v445
                  %v447 = vld [vmem:[%s349 + $0x300] sm:$0xff]
                  %448 = vst [vmem:[%s350 + $0x180] sm:$0xff] %v447
                  %v449 = vld [vmem:[%s349 + $0x310] sm:$0xff]
                  %450 = vst [vmem:[%s350 + $0x188] sm:$0xff] %v449
                  %v451 = vld [vmem:[%s349 + $0x320] sm:$0xff]
                  %452 = vst [vmem:[%s350 + $0x190] sm:$0xff] %v451
                  %v453 = vld [vmem:[%s349 + $0x330] sm:$0xff]
                  %454 = vst [vmem:[%s350 + $0x198] sm:$0xff] %v453
                  %v455 = vld [vmem:[%s349 + $0x340] sm:$0xff]
                  %456 = vst [vmem:[%s350 + $0x1a0] sm:$0xff] %v455
                  %v457 = vld [vmem:[%s349 + $0x350] sm:$0xff]
                  %458 = vst [vmem:[%s350 + $0x1a8] sm:$0xff] %v457
                  %v459 = vld [vmem:[%s349 + $0x360] sm:$0xff]
                  %460 = vst [vmem:[%s350 + $0x1b0] sm:$0xff] %v459
                  %v461 = vld [vmem:[%s349 + $0x370] sm:$0xff]
                  %462 = vst [vmem:[%s350 + $0x1b8] sm:$0xff] %v461
                  %v463 = vld [vmem:[%s349 + $0x380] sm:$0xff]
                  %464 = vst [vmem:[%s350 + $0x1c0] sm:$0xff] %v463
                  %v465 = vld [vmem:[%s349 + $0x390] sm:$0xff]
                  %466 = vst [vmem:[%s350 + $0x1c8] sm:$0xff] %v465
                  %v467 = vld [vmem:[%s349 + $0x3a0] sm:$0xff]
                  %468 = vst [vmem:[%s350 + $0x1d0] sm:$0xff] %v467
                  %v469 = vld [vmem:[%s349 + $0x3b0] sm:$0xff]
                  %470 = vst [vmem:[%s350 + $0x1d8] sm:$0xff] %v469
                $region64: #{fused_double_conv_transpose.1} parent=58 // loop_footer
                  %s348 = sadd.s32 1, %s344
                $region65: #{fused_double_conv_transpose.1} parent=58 // loop_footer_branch
                  %343 = sbr.rel target = $region61
                $region66: #{fused_double_conv_transpose.1} parent=58 // loop_exit
                  _
              $region59: #{fused_double_conv_transpose.1} parent=43 // pred_fallthru
                _
              // Predicated region
              $region67: #{fused_double_conv_transpose.1} parent=43 // pred_check
                _
              $region68: #{fused_double_conv_transpose.1} parent=43 // pred_check_branch
                %472 = sbr.rel target = $region70
              $region69: #{fused_double_conv_transpose.1} parent=43 // pred_region
                _
              $region70: #{fused_double_conv_transpose.1} parent=43 // pred_fallthru
                _
            $region44: #{fused_double_conv_transpose.1} parent=39 // pred_fallthru
              _
            // Predicated region
            $region45: #{fused_double_conv_transpose.1} parent=39 // pred_check
              _
            $region46: #{fused_double_conv_transpose.1} parent=39 // pred_check_branch
              %210 = sbr.rel target = $region48
            $region47: #{fused_double_conv_transpose.1} parent=39 // pred_region
              %s212 = ssub.s32 256, 1
              loop: start=0, step=1, limit=1
              $region49: #{fused_double_conv_transpose.1} parent=47 // loop_pre_header
                _
              $region50: #{fused_double_conv_transpose.1} parent=47 // loop_header
                %s214 = sphi 0, %s218
                %p215 = scmp.ge.s32.totalorder %s214, 1
                %s219 = sphi %s204, %s204
                %s220 = sphi %s200, %s200
              $region51: #{fused_double_conv_transpose.1} parent=47 // loop_header_branch
                %217 = sbr.rel (%p215) target = $region55
              $region52: #{fused_double_conv_transpose.1} parent=47 // loop_body
                %v221 = vld [vmem:[%s219] sm:%s212]
                %222 = vst [vmem:[%s220] sm:%s212] %v221
                %v223 = vld [vmem:[%s219 + $0x10] sm:%s212]
                %224 = vst [vmem:[%s220 + $0x8] sm:%s212] %v223
                %v225 = vld [vmem:[%s219 + $0x20] sm:%s212]
                %226 = vst [vmem:[%s220 + $0x10] sm:%s212] %v225
                %v227 = vld [vmem:[%s219 + $0x30] sm:%s212]
                %228 = vst [vmem:[%s220 + $0x18] sm:%s212] %v227
                %v229 = vld [vmem:[%s219 + $0x40] sm:%s212]
                %230 = vst [vmem:[%s220 + $0x20] sm:%s212] %v229
                %v231 = vld [vmem:[%s219 + $0x50] sm:%s212]
                %232 = vst [vmem:[%s220 + $0x28] sm:%s212] %v231
                %v233 = vld [vmem:[%s219 + $0x60] sm:%s212]
                %234 = vst [vmem:[%s220 + $0x30] sm:%s212] %v233
                %v235 = vld [vmem:[%s219 + $0x70] sm:%s212]
                %236 = vst [vmem:[%s220 + $0x38] sm:%s212] %v235
                %v237 = vld [vmem:[%s219 + $0x80] sm:%s212]
                %238 = vst [vmem:[%s220 + $0x40] sm:%s212] %v237
                %v239 = vld [vmem:[%s219 + $0x90] sm:%s212]
                %240 = vst [vmem:[%s220 + $0x48] sm:%s212] %v239
                %v241 = vld [vmem:[%s219 + $0xa0] sm:%s212]
                %242 = vst [vmem:[%s220 + $0x50] sm:%s212] %v241
                %v243 = vld [vmem:[%s219 + $0xb0] sm:%s212]
                %244 = vst [vmem:[%s220 + $0x58] sm:%s212] %v243
                %v245 = vld [vmem:[%s219 + $0xc0] sm:%s212]
                %246 = vst [vmem:[%s220 + $0x60] sm:%s212] %v245
                %v247 = vld [vmem:[%s219 + $0xd0] sm:%s212]
                %248 = vst [vmem:[%s220 + $0x68] sm:%s212] %v247
                %v249 = vld [vmem:[%s219 + $0xe0] sm:%s212]
                %250 = vst [vmem:[%s220 + $0x70] sm:%s212] %v249
                %v251 = vld [vmem:[%s219 + $0xf0] sm:%s212]
                %252 = vst [vmem:[%s220 + $0x78] sm:%s212] %v251
                %v253 = vld [vmem:[%s219 + $0x100] sm:%s212]
                %254 = vst [vmem:[%s220 + $0x80] sm:%s212] %v253
                %v255 = vld [vmem:[%s219 + $0x110] sm:%s212]
                %256 = vst [vmem:[%s220 + $0x88] sm:%s212] %v255
                %v257 = vld [vmem:[%s219 + $0x120] sm:%s212]
                %258 = vst [vmem:[%s220 + $0x90] sm:%s212] %v257
                %v259 = vld [vmem:[%s219 + $0x130] sm:%s212]
                %260 = vst [vmem:[%s220 + $0x98] sm:%s212] %v259
                %v261 = vld [vmem:[%s219 + $0x140] sm:%s212]
                %262 = vst [vmem:[%s220 + $0xa0] sm:%s212] %v261
                %v263 = vld [vmem:[%s219 + $0x150] sm:%s212]
                %264 = vst [vmem:[%s220 + $0xa8] sm:%s212] %v263
                %v265 = vld [vmem:[%s219 + $0x160] sm:%s212]
                %266 = vst [vmem:[%s220 + $0xb0] sm:%s212] %v265
                %v267 = vld [vmem:[%s219 + $0x170] sm:%s212]
                %268 = vst [vmem:[%s220 + $0xb8] sm:%s212] %v267
                %v269 = vld [vmem:[%s219 + $0x180] sm:%s212]
                %270 = vst [vmem:[%s220 + $0xc0] sm:%s212] %v269
                %v271 = vld [vmem:[%s219 + $0x190] sm:%s212]
                %272 = vst [vmem:[%s220 + $0xc8] sm:%s212] %v271
                %v273 = vld [vmem:[%s219 + $0x1a0] sm:%s212]
                %274 = vst [vmem:[%s220 + $0xd0] sm:%s212] %v273
                %v275 = vld [vmem:[%s219 + $0x1b0] sm:%s212]
                %276 = vst [vmem:[%s220 + $0xd8] sm:%s212] %v275
                %v277 = vld [vmem:[%s219 + $0x1c0] sm:%s212]
                %278 = vst [vmem:[%s220 + $0xe0] sm:%s212] %v277
                %v279 = vld [vmem:[%s219 + $0x1d0] sm:%s212]
                %280 = vst [vmem:[%s220 + $0xe8] sm:%s212] %v279
                %v281 = vld [vmem:[%s219 + $0x1e0] sm:%s212]
                %282 = vst [vmem:[%s220 + $0xf0] sm:%s212] %v281
                %v283 = vld [vmem:[%s219 + $0x1f0] sm:%s212]
                %284 = vst [vmem:[%s220 + $0xf8] sm:%s212] %v283
                %v285 = vld [vmem:[%s219 + $0x200] sm:%s212]
                %286 = vst [vmem:[%s220 + $0x100] sm:%s212] %v285
                %v287 = vld [vmem:[%s219 + $0x210] sm:%s212]
                %288 = vst [vmem:[%s220 + $0x108] sm:%s212] %v287
                %v289 = vld [vmem:[%s219 + $0x220] sm:%s212]
                %290 = vst [vmem:[%s220 + $0x110] sm:%s212] %v289
                %v291 = vld [vmem:[%s219 + $0x230] sm:%s212]
                %292 = vst [vmem:[%s220 + $0x118] sm:%s212] %v291
                %v293 = vld [vmem:[%s219 + $0x240] sm:%s212]
                %294 = vst [vmem:[%s220 + $0x120] sm:%s212] %v293
                %v295 = vld [vmem:[%s219 + $0x250] sm:%s212]
                %296 = vst [vmem:[%s220 + $0x128] sm:%s212] %v295
                %v297 = vld [vmem:[%s219 + $0x260] sm:%s212]
                %298 = vst [vmem:[%s220 + $0x130] sm:%s212] %v297
                %v299 = vld [vmem:[%s219 + $0x270] sm:%s212]
                %300 = vst [vmem:[%s220 + $0x138] sm:%s212] %v299
                %v301 = vld [vmem:[%s219 + $0x280] sm:%s212]
                %302 = vst [vmem:[%s220 + $0x140] sm:%s212] %v301
                %v303 = vld [vmem:[%s219 + $0x290] sm:%s212]
                %304 = vst [vmem:[%s220 + $0x148] sm:%s212] %v303
                %v305 = vld [vmem:[%s219 + $0x2a0] sm:%s212]
                %306 = vst [vmem:[%s220 + $0x150] sm:%s212] %v305
                %v307 = vld [vmem:[%s219 + $0x2b0] sm:%s212]
                %308 = vst [vmem:[%s220 + $0x158] sm:%s212] %v307
                %v309 = vld [vmem:[%s219 + $0x2c0] sm:%s212]
                %310 = vst [vmem:[%s220 + $0x160] sm:%s212] %v309
                %v311 = vld [vmem:[%s219 + $0x2d0] sm:%s212]
                %312 = vst [vmem:[%s220 + $0x168] sm:%s212] %v311
                %v313 = vld [vmem:[%s219 + $0x2e0] sm:%s212]
                %314 = vst [vmem:[%s220 + $0x170] sm:%s212] %v313
                %v315 = vld [vmem:[%s219 + $0x2f0] sm:%s212]
                %316 = vst [vmem:[%s220 + $0x178] sm:%s212] %v315
                %v317 = vld [vmem:[%s219 + $0x300] sm:%s212]
                %318 = vst [vmem:[%s220 + $0x180] sm:%s212] %v317
                %v319 = vld [vmem:[%s219 + $0x310] sm:%s212]
                %320 = vst [vmem:[%s220 + $0x188] sm:%s212] %v319
                %v321 = vld [vmem:[%s219 + $0x320] sm:%s212]
                %322 = vst [vmem:[%s220 + $0x190] sm:%s212] %v321
                %v323 = vld [vmem:[%s219 + $0x330] sm:%s212]
                %324 = vst [vmem:[%s220 + $0x198] sm:%s212] %v323
                %v325 = vld [vmem:[%s219 + $0x340] sm:%s212]
                %326 = vst [vmem:[%s220 + $0x1a0] sm:%s212] %v325
                %v327 = vld [vmem:[%s219 + $0x350] sm:%s212]
                %328 = vst [vmem:[%s220 + $0x1a8] sm:%s212] %v327
                %v329 = vld [vmem:[%s219 + $0x360] sm:%s212]
                %330 = vst [vmem:[%s220 + $0x1b0] sm:%s212] %v329
                %v331 = vld [vmem:[%s219 + $0x370] sm:%s212]
                %332 = vst [vmem:[%s220 + $0x1b8] sm:%s212] %v331
                %v333 = vld [vmem:[%s219 + $0x380] sm:%s212]
                %334 = vst [vmem:[%s220 + $0x1c0] sm:%s212] %v333
                %v335 = vld [vmem:[%s219 + $0x390] sm:%s212]
                %336 = vst [vmem:[%s220 + $0x1c8] sm:%s212] %v335
                %v337 = vld [vmem:[%s219 + $0x3a0] sm:%s212]
                %338 = vst [vmem:[%s220 + $0x1d0] sm:%s212] %v337
                %v339 = vld [vmem:[%s219 + $0x3b0] sm:%s212]
                %340 = vst [vmem:[%s220 + $0x1d8] sm:%s212] %v339
              $region53: #{fused_double_conv_transpose.1} parent=47 // loop_footer
                %s218 = sadd.s32 1, %s214
              $region54: #{fused_double_conv_transpose.1} parent=47 // loop_footer_branch
                %213 = sbr.rel target = $region50
              $region55: #{fused_double_conv_transpose.1} parent=47 // loop_exit
                _
            $region48: #{fused_double_conv_transpose.1} parent=39 // pred_fallthru
              _
          $region40: #{fused_double_conv_transpose.1} parent=35 // pred_fallthru
            _
          %473 = vnop
        $region36: #{fused_double_conv_transpose.1} parent=31 // pred_fallthru
          _
      $region32: #{fused_double_conv_transpose.1} parent=5 // pred_fallthru
        _
      %p474 = scmp.le.s32.totalorder 1, %s11
      %p475 = scmp.lt.s32.totalorder %s11, 5
      %p476 = pnand %p474, %p475
      %p477 = pneg %p476
      // Predicated region
      $region71: #{fused_double_conv_transpose.1} parent=5 // pred_check
        _
      $region72: #{fused_double_conv_transpose.1} parent=5 // pred_check_branch
        %479 = sbr.rel (%p476) target = $region74
      $region73: #{fused_double_conv_transpose.1} parent=5 // pred_region
        %s480 = ssub.s32 %s11, 1
        %s481 = sand.u32 %s38, 1
        %s482 = sand.u32 %s38, 1
        %s483 = smul.addr %s482, 480
        %s484 = scalar_lea.vmem [#allocation2], %s483
        // Predicated region
        $region75: #{fused_double_conv_transpose.1} parent=73 // pred_check
          %p485 = pneg %p51
        $region76: #{fused_double_conv_transpose.1} parent=73 // pred_check_branch
          %487 = sbr.rel (%p485) target = $region78
        $region77: #{fused_double_conv_transpose.1} parent=73 // pred_region
          _
        $region78: #{fused_double_conv_transpose.1} parent=73 // pred_fallthru
          _
        %s488 = sand.u32 %s38, 1
        %s489 = sand.u32 %s38, 1
        %s490 = smul.addr %s489, 480
        %s491 = scalar_lea.vmem [#allocation2], %s490
        %p492 = pneg %p51
        %p493 = pneg %p48
        %p494 = pneg %p72
        %p495 = pneg %p69
        %p496 = pneg %p93
        %p497 = pneg %p90
        %p498 = pneg %p114
        %p499 = pneg %p111
        %p500 = pneg %p135
        %p501 = pneg %p132
        %p502 = pneg %p163
        %p503 = pneg %p160
        %s504 = sand.u32 %s150, 1
        %s505 = sand.u32 %s150, 1
        %s506 = smul.addr %s505, 544
        %s507 = scalar_lea.vmem [#allocation3], %s506
        %v508 = vld [vmem:[%s1] sm:$0xff]
        %v509 = vld [vmem:[%s1 + $0x8] sm:$0xff]
        %v510 = vld [vmem:[%s1 + $0x10] sm:$0xff]
        %v511 = vld [vmem:[%s1 + $0x18] sm:$0xff]
        %v512 = vld [vmem:[%s1 + $0x20] sm:$0xff]
        %v513 = vld [vmem:[%s1 + $0x28] sm:$0xff]
        %v514 = vld [vmem:[%s1 + $0x30] sm:$0xff]
        %v515 = vld [vmem:[%s1 + $0x38] sm:$0xff]
        %v516 = vld [vmem:[%s1 + $0x40] sm:$0xff]
        %v517 = vld [vmem:[%s1 + $0x48] sm:$0xff]
        %v518 = vld [vmem:[%s1 + $0x50] sm:$0xff]
        %v519 = vld [vmem:[%s1 + $0x58] sm:$0xff]
        %v520 = vld [vmem:[%s1 + $0x60] sm:$0xff]
        %v521 = vld [vmem:[%s1 + $0x68] sm:$0xff]
        %v522 = vld [vmem:[%s1 + $0x70] sm:$0xff]
        %v523 = vld [vmem:[%s1 + $0x78] sm:$0xff]
        %v524 = vld [vmem:[%s484] sm:$0xff]
        %v525 = vld [vmem:[%s484 + $0x8] sm:$0xff]
        %v526 = vld [vmem:[%s484 + $0x10] sm:$0xff]
        %v527 = vld [vmem:[%s484 + $0x18] sm:$0xff]
        %v528 = vld [vmem:[%s484 + $0x20] sm:$0xff]
        %v529 = vld [vmem:[%s484 + $0x28] sm:$0xff]
        %v530 = vld [vmem:[%s484 + $0x30] sm:$0xff]
        %v531 = vld [vmem:[%s484 + $0x38] sm:$0xff]
        %v532 = vld [vmem:[%s484 + $0x40] sm:$0xff]
        %v533 = vld [vmem:[%s484 + $0x48] sm:$0xff]
        %v534 = vld [vmem:[%s484 + $0x50] sm:$0xff]
        %v535 = vld [vmem:[%s484 + $0x58] sm:$0xff]
        %v536 = vld [vmem:[%s484 + $0x60] sm:$0xff]
        %v537 = vld [vmem:[%s484 + $0x68] sm:$0xff]
        %v538 = vld [vmem:[%s484 + $0x70] sm:$0xff]
        %v539 = vld [vmem:[%s484 + $0x78] sm:$0xff]
        %v540 = vld [vmem:[%s484 + $0x80] sm:$0xff]
        %v541 = vld [vmem:[%s484 + $0x88] sm:$0xff]
        %v542 = vld [vmem:[%s484 + $0x90] sm:$0xff]
        %v543 = vld [vmem:[%s484 + $0x98] sm:$0xff]
        %v544 = vld [vmem:[%s484 + $0xa0] sm:$0xff]
        %v545 = vld [vmem:[%s484 + $0xa8] sm:$0xff]
        %v546 = vld [vmem:[%s484 + $0xb0] sm:$0xff]
        %v547 = vld [vmem:[%s484 + $0xb8] sm:$0xff]
        %v548 = vld [vmem:[%s484 + $0xc0] sm:$0xff]
        %v549 = vld [vmem:[%s484 + $0xc8] sm:$0xff]
        %v550 = vld [vmem:[%s484 + $0xd0] sm:$0xff]
        %v551 = vld [vmem:[%s484 + $0xd8] sm:$0xff]
        %v552 = vld [vmem:[%s484 + $0xe0] sm:$0xff]
        %v553 = vld [vmem:[%s484 + $0xe8] sm:$0xff]
        %v554 = vld [vmem:[%s484 + $0xf0] sm:$0xff]
        %v555 = vld [vmem:[%s484 + $0xf8] sm:$0xff]
        %v556 = vld [vmem:[%s484 + $0x100] sm:$0xff]
        %v557 = vld [vmem:[%s484 + $0x108] sm:$0xff]
        %v558 = vld [vmem:[%s484 + $0x110] sm:$0xff]
        %v559 = vld [vmem:[%s484 + $0x118] sm:$0xff]
        %v560 = vld [vmem:[%s484 + $0x120] sm:$0xff]
        %v561 = vld [vmem:[%s484 + $0x128] sm:$0xff]
        %v562 = vld [vmem:[%s484 + $0x130] sm:$0xff]
        %v563 = vld [vmem:[%s484 + $0x138] sm:$0xff]
        %v564 = vld [vmem:[%s484 + $0x140] sm:$0xff]
        %v565 = vld [vmem:[%s484 + $0x148] sm:$0xff]
        %v566 = vld [vmem:[%s484 + $0x150] sm:$0xff]
        %v567 = vld [vmem:[%s484 + $0x158] sm:$0xff]
        %v568 = vld [vmem:[%s484 + $0x160] sm:$0xff]
        %v569 = vld [vmem:[%s484 + $0x168] sm:$0xff]
        %v570 = vld [vmem:[%s484 + $0x170] sm:$0xff]
        %v571 = vld [vmem:[%s484 + $0x178] sm:$0xff]
        %v572 = vld [vmem:[%s484 + $0x180] sm:$0xff]
        %v573 = vld [vmem:[%s484 + $0x188] sm:$0xff]
        %v574 = vld [vmem:[%s484 + $0x190] sm:$0xff]
        %v575 = vld [vmem:[%s484 + $0x198] sm:$0xff]
        %v576 = vld [vmem:[%s484 + $0x1a0] sm:$0xff]
        %v577 = vld [vmem:[%s484 + $0x1a8] sm:$0xff]
        %v578 = vld [vmem:[%s484 + $0x1b0] sm:$0xff]
        %v579 = vld [vmem:[%s484 + $0x1b8] sm:$0xff]
        %v580 = vld [vmem:[%s484 + $0x1c0] sm:$0xff]
        %v581 = vld [vmem:[%s484 + $0x1c8] sm:$0xff]
        %v582 = vld [vmem:[%s484 + $0x1d0] sm:$0xff]
        %v583 = vld [vmem:[%s484 + $0x1d8] sm:$0xff]
        %v584 = vld [vmem:[%s2] sm:$0xff]
        %v585 = vld [vmem:[%s2 + $0x8] sm:$0xff]
        %v586 = vld [vmem:[%s2 + $0x10] sm:$0xff]
        %v587 = vld [vmem:[%s2 + $0x18] sm:$0xff]
        %589 = vset.pattern.permute.xlu0 0
        %590 = vperm.xlu0 %589, %v584
        %v591 = vpop.permute.xlu0 %590
        %594 = vset.pattern.permute.xlu0 0
        %595 = vperm.xlu0 %594, %v585
        %v596 = vpop.permute.xlu0 %595
        %599 = vset.pattern.permute.xlu0 0
        %600 = vperm.xlu0 %599, %v586
        %v601 = vpop.permute.xlu0 %600
        %604 = vset.pattern.permute.xlu0 0
        %605 = vperm.xlu0 %604, %v587
        %v606 = vpop.permute.xlu0 %605
        %vm608 = vcmask 785408
        %v610 = vsel %vm608, %v511, 0
        %v613 = vsel %vm608, %v515, 0
        %v616 = vsel %vm608, %v519, 0
        %v619 = vsel %vm608, %v523, 0
        %621 = vmatprep.subr.mxu0 0.0
        %622 = vmatpush1.msra.mxu0 %v539
        %623 = vmatprep.subr.mxu0 0.0
        %624 = vmatpush1.msra.mxu0 %v538
        %625 = vmatprep.subr.mxu0 0.0
        %626 = vmatpush1.msra.mxu0 %v537
        %627 = vmatprep.subr.mxu0 0.0
        %628 = vmatpush1.msra.mxu0 %v536
        %629 = vmatprep.subr.mxu0 0.0
        %630 = vmatpush1.msra.mxu0 %v535
        %631 = vmatprep.subr.mxu0 0.0
        %632 = vmatpush1.msra.mxu0 %v534
        %633 = vmatprep.subr.mxu0 0.0
        %634 = vmatpush1.msra.mxu0 %v533
        %635 = vmatprep.subr.mxu0 0.0
        %636 = vmatpush1.msra.mxu0 %v532
        %637 = vmatprep.subr.mxu0 0.0
        %638 = vmatpush1.msra.mxu0 %v531
        %639 = vmatprep.subr.mxu0 0.0
        %640 = vmatpush1.msra.mxu0 %v530
        %641 = vmatprep.subr.mxu0 0.0
        %642 = vmatpush1.msra.mxu0 %v529
        %643 = vmatprep.subr.mxu0 0.0
        %644 = vmatpush1.msra.mxu0 %v528
        %645 = vmatprep.subr.mxu0 0.0
        %646 = vmatpush1.msra.mxu0 %v527
        %647 = vmatprep.subr.mxu0 0.0
        %648 = vmatpush1.msra.mxu0 %v526
        %649 = vmatprep.subr.mxu0 0.0
        %650 = vmatpush1.msra.mxu0 %v525
        %651 = vmatprep.subr.mxu0 0.0
        %652 = vmatpush1.msra.mxu0 %v524
        %653 = vmatprep.subr.mxu0 0.0
        %654 = vmatpush2.msra.mxu0 %v555
        %655 = vmatprep.subr.mxu0 0.0
        %656 = vmatpush2.msra.mxu0 %v554
        %657 = vmatprep.subr.mxu0 0.0
        %658 = vmatpush2.msra.mxu0 %v553
        %659 = vmatprep.subr.mxu0 0.0
        %660 = vmatpush2.msra.mxu0 %v552
        %661 = vmatprep.subr.mxu0 0.0
        %662 = vmatpush2.msra.mxu0 %v551
        %663 = vmatprep.subr.mxu0 0.0
        %664 = vmatpush2.msra.mxu0 %v550
        %665 = vmatprep.subr.mxu0 0.0
        %666 = vmatpush2.msra.mxu0 %v549
        %667 = vmatprep.subr.mxu0 0.0
        %668 = vmatpush2.msra.mxu0 %v548
        %669 = vmatprep.subr.mxu0 0.0
        %670 = vmatpush2.msra.mxu0 %v547
        %671 = vmatprep.subr.mxu0 0.0
        %672 = vmatpush2.msra.mxu0 %v546
        %673 = vmatprep.subr.mxu0 0.0
        %674 = vmatpush2.msra.mxu0 %v545
        %675 = vmatprep.subr.mxu0 0.0
        %676 = vmatpush2.msra.mxu0 %v544
        %677 = vmatprep.subr.mxu0 0.0
        %678 = vmatpush2.msra.mxu0 %v543
        %679 = vmatprep.subr.mxu0 0.0
        %680 = vmatpush2.msra.mxu0 %v542
        %681 = vmatprep.subr.mxu0 0.0
        %682 = vmatpush2.msra.mxu0 %v541
        %683 = vmatprep.subr.mxu0 0.0
        %684 = vmatpush2.msra.mxu0 %v540
        %685 = vmatprep.mubr.f32.mxu0 %v509
        %686 = vmatmul.mubr.f32.gmra.mxu0 %v508
        %v687 = vpop.f32.mrf.mxu0
        %v688 = vadd.f32 %v591, %v687
        %v689 = vpop.f32.mrf.mxu0
        %690 = vmatprep.mubr.f32.mxu0 %v513
        %691 = vmatmul.mubr.f32.gmra.mxu0 %v512
        %v692 = vpop.f32.mrf.mxu0
        %v693 = vadd.f32 %v596, %v692
        %v694 = vpop.f32.mrf.mxu0
        %695 = vmatprep.mubr.f32.mxu0 %v517
        %696 = vmatmul.mubr.f32.gmra.mxu0 %v516
        %v697 = vpop.f32.mrf.mxu0
        %v698 = vadd.f32 %v601, %v697
        %v699 = vpop.f32.mrf.mxu0
        %700 = vmatprep.mubr.f32.mxu0 %v521
        %701 = vmatmul.mubr.f32.gmra.mxu0 %v520
        %v702 = vpop.f32.mrf.mxu0
        %v703 = vadd.f32 %v606, %v702
        %v704 = vpop.f32.mrf.mxu0
        %705 = vdwg.mxu0
        %706 = vmatprep.subr.mxu0 0.0
        %707 = vmatpush1.msra.mxu0 %v571
        %708 = vmatprep.subr.mxu0 0.0
        %709 = vmatpush1.msra.mxu0 %v570
        %710 = vmatprep.subr.mxu0 0.0
        %711 = vmatpush1.msra.mxu0 %v569
        %712 = vmatprep.subr.mxu0 0.0
        %713 = vmatpush1.msra.mxu0 %v568
        %714 = vmatprep.subr.mxu0 0.0
        %715 = vmatpush1.msra.mxu0 %v567
        %716 = vmatprep.subr.mxu0 0.0
        %717 = vmatpush1.msra.mxu0 %v566
        %718 = vmatprep.subr.mxu0 0.0
        %719 = vmatpush1.msra.mxu0 %v565
        %720 = vmatprep.subr.mxu0 0.0
        %721 = vmatpush1.msra.mxu0 %v564
        %722 = vmatprep.subr.mxu0 0.0
        %723 = vmatpush1.msra.mxu0 %v563
        %724 = vmatprep.subr.mxu0 0.0
        %725 = vmatpush1.msra.mxu0 %v562
        %726 = vmatprep.subr.mxu0 0.0
        %727 = vmatpush1.msra.mxu0 %v561
        %728 = vmatprep.subr.mxu0 0.0
        %729 = vmatpush1.msra.mxu0 %v560
        %730 = vmatprep.subr.mxu0 0.0
        %731 = vmatpush1.msra.mxu0 %v559
        %732 = vmatprep.subr.mxu0 0.0
        %733 = vmatpush1.msra.mxu0 %v558
        %734 = vmatprep.subr.mxu0 0.0
        %735 = vmatpush1.msra.mxu0 %v557
        %736 = vmatprep.subr.mxu0 0.0
        %737 = vmatpush1.msra.mxu0 %v556
        %738 = vmatprep.subr.mxu0 0.0
        %739 = vmatpush2.msra.mxu0 0.0
        %740 = vmatprep.subr.mxu0 0.0
        %741 = vmatpush2.msra.mxu0 0.0
        %742 = vmatprep.subr.mxu0 0.0
        %743 = vmatpush2.msra.mxu0 0.0
        %744 = vmatprep.subr.mxu0 0.0
        %745 = vmatpush2.msra.mxu0 0.0
        %746 = vmatprep.subr.mxu0 0.0
        %747 = vmatpush2.msra.mxu0 %v583
        %748 = vmatprep.subr.mxu0 0.0
        %749 = vmatpush2.msra.mxu0 %v582
        %750 = vmatprep.subr.mxu0 0.0
        %751 = vmatpush2.msra.mxu0 %v581
        %752 = vmatprep.subr.mxu0 0.0
        %753 = vmatpush2.msra.mxu0 %v580
        %754 = vmatprep.subr.mxu0 0.0
        %755 = vmatpush2.msra.mxu0 %v579
        %756 = vmatprep.subr.mxu0 0.0
        %757 = vmatpush2.msra.mxu0 %v578
        %758 = vmatprep.subr.mxu0 0.0
        %759 = vmatpush2.msra.mxu0 %v577
        %760 = vmatprep.subr.mxu0 0.0
        %761 = vmatpush2.msra.mxu0 %v576
        %762 = vmatprep.subr.mxu0 0.0
        %763 = vmatpush2.msra.mxu0 %v575
        %764 = vmatprep.subr.mxu0 0.0
        %765 = vmatpush2.msra.mxu0 %v574
        %766 = vmatprep.subr.mxu0 0.0
        %767 = vmatpush2.msra.mxu0 %v573
        %768 = vmatprep.subr.mxu0 0.0
        %769 = vmatpush2.msra.mxu0 %v572
        %770 = vmatprep.mubr.f32.mxu0 %v610
        %771 = vmatmul.mubr.f32.gmra.mxu0 %v510
        %v772 = vpop.f32.mrf.mxu0
        %v773 = vadd.f32 %v688, %v772
        %v774 = vpop.f32.mrf.mxu0
        %775 = vmatprep.mubr.f32.mxu0 %v613
        %776 = vmatmul.mubr.f32.gmra.mxu0 %v514
        %v777 = vpop.f32.mrf.mxu0
        %v778 = vadd.f32 %v693, %v777
        %v779 = vpop.f32.mrf.mxu0
        %780 = vmatprep.mubr.f32.mxu0 %v616
        %781 = vmatmul.mubr.f32.gmra.mxu0 %v518
        %v782 = vpop.f32.mrf.mxu0
        %v783 = vadd.f32 %v698, %v782
        %v784 = vpop.f32.mrf.mxu0
        %785 = vmatprep.mubr.f32.mxu0 %v619
        %786 = vmatmul.mubr.f32.gmra.mxu0 %v522
        %v787 = vpop.f32.mrf.mxu0
        %v788 = vadd.f32 %v703, %v787
        %v789 = vpop.f32.mrf.mxu0
        %790 = vdwg.mxu0
        %vm791 = vcmp.gt.f32.partialorder %v773, 0.0
        %vm792 = vcmp.gt.f32.partialorder %v778, 0.0
        %vm793 = vcmp.gt.f32.partialorder %v783, 0.0
        %vm794 = vcmp.gt.f32.partialorder %v788, 0.0
        %v795 = vmul.f32 %v773, 0.5
        %v796 = vmul.f32 %v778, 0.5
        %v797 = vmul.f32 %v783, 0.5
        %v798 = vmul.f32 %v788, 0.5
        %v799 = vsel %vm791, %v773, %v795
        %v800 = vsel %vm792, %v778, %v796
        %v801 = vsel %vm793, %v783, %v797
        %v802 = vsel %vm794, %v788, %v798
        %v803 = vld [vmem:[%s3] sm:$0xff]
        %v804 = vld [vmem:[%s3 + $0x8] sm:$0xff]
        %v805 = vld [vmem:[%s3 + $0x10] sm:$0xff]
        %v806 = vld [vmem:[%s3 + $0x18] sm:$0xff]
        %v807 = vld [vmem:[%s3 + $0x20] sm:$0xff]
        %v808 = vld [vmem:[%s3 + $0x28] sm:$0xff]
        %v809 = vld [vmem:[%s3 + $0x30] sm:$0xff]
        %v810 = vld [vmem:[%s3 + $0x38] sm:$0xff]
        %v811 = vld [vmem:[%s3 + $0x40] sm:$0xff]
        %v812 = vld [vmem:[%s3 + $0x48] sm:$0xff]
        %v813 = vld [vmem:[%s3 + $0x50] sm:$0xff]
        %v814 = vld [vmem:[%s3 + $0x58] sm:$0xff]
        %v815 = vld [vmem:[%s3 + $0x60] sm:$0xff]
        %v816 = vld [vmem:[%s3 + $0x68] sm:$0xff]
        %v817 = vld [vmem:[%s3 + $0x70] sm:$0xff]
        %v818 = vld [vmem:[%s3 + $0x78] sm:$0xff]
        %v819 = vld [vmem:[%s3 + $0x80] sm:$0xff]
        %v820 = vld [vmem:[%s3 + $0x88] sm:$0xff]
        %v821 = vld [vmem:[%s3 + $0x90] sm:$0xff]
        %v822 = vld [vmem:[%s3 + $0x98] sm:$0xff]
        %v823 = vld [vmem:[%s3 + $0xa0] sm:$0xff]
        %v824 = vld [vmem:[%s3 + $0xa8] sm:$0xff]
        %v825 = vld [vmem:[%s3 + $0xb0] sm:$0xff]
        %v826 = vld [vmem:[%s3 + $0xb8] sm:$0xff]
        %v827 = vld [vmem:[%s3 + $0xc0] sm:$0xff]
        %v828 = vld [vmem:[%s3 + $0xc8] sm:$0xff]
        %v829 = vld [vmem:[%s3 + $0xd0] sm:$0xff]
        %v830 = vld [vmem:[%s3 + $0xd8] sm:$0xff]
        %v831 = vld [vmem:[%s3 + $0xe0] sm:$0xff]
        %v832 = vld [vmem:[%s3 + $0xe8] sm:$0xff]
        %v833 = vld [vmem:[%s3 + $0xf0] sm:$0xff]
        %v834 = vld [vmem:[%s3 + $0xf8] sm:$0xff]
        %v835 = vld [vmem:[%s3 + $0x100] sm:$0xff]
        %v836 = vld [vmem:[%s3 + $0x108] sm:$0xff]
        %v837 = vld [vmem:[%s3 + $0x110] sm:$0xff]
        %v838 = vld [vmem:[%s3 + $0x118] sm:$0xff]
        %v839 = vld [vmem:[%s3 + $0x120] sm:$0xff]
        %v840 = vld [vmem:[%s3 + $0x128] sm:$0xff]
        %v841 = vld [vmem:[%s3 + $0x130] sm:$0xff]
        %v842 = vld [vmem:[%s3 + $0x138] sm:$0xff]
        %v843 = vld [vmem:[%s3 + $0x140] sm:$0xff]
        %v844 = vld [vmem:[%s3 + $0x148] sm:$0xff]
        %v845 = vld [vmem:[%s3 + $0x150] sm:$0xff]
        %v846 = vld [vmem:[%s3 + $0x158] sm:$0xff]
        %v847 = vld [vmem:[%s3 + $0x160] sm:$0xff]
        %v848 = vld [vmem:[%s3 + $0x168] sm:$0xff]
        %v849 = vld [vmem:[%s3 + $0x170] sm:$0xff]
        %v850 = vld [vmem:[%s3 + $0x178] sm:$0xff]
        %v851 = vld [vmem:[%s3 + $0x180] sm:$0xff]
        %v852 = vld [vmem:[%s3 + $0x188] sm:$0xff]
        %v853 = vld [vmem:[%s3 + $0x190] sm:$0xff]
        %v854 = vld [vmem:[%s3 + $0x198] sm:$0xff]
        %v855 = vld [vmem:[%s3 + $0x1a0] sm:$0xff]
        %v856 = vld [vmem:[%s3 + $0x1a8] sm:$0xff]
        %v857 = vld [vmem:[%s3 + $0x1b0] sm:$0xff]
        %v858 = vld [vmem:[%s3 + $0x1b8] sm:$0xff]
        %v859 = vld [vmem:[%s3 + $0x1c0] sm:$0xff]
        %v860 = vld [vmem:[%s3 + $0x1c8] sm:$0xff]
        %v861 = vld [vmem:[%s3 + $0x1d0] sm:$0xff]
        %v862 = vld [vmem:[%s3 + $0x1d8] sm:$0xff]
        %v863 = vld [vmem:[%s3 + $0x1e0] sm:$0xff]
        %v864 = vld [vmem:[%s3 + $0x1e8] sm:$0xff]
        %v865 = vld [vmem:[%s3 + $0x1f0] sm:$0xff]
        %v866 = vld [vmem:[%s3 + $0x1f8] sm:$0xff]
        %v867 = vld [vmem:[%s3 + $0x200] sm:$0xff]
        %v868 = vld [vmem:[%s3 + $0x208] sm:$0xff]
        %v869 = vld [vmem:[%s3 + $0x210] sm:$0xff]
        %v870 = vld [vmem:[%s3 + $0x218] sm:$0xf]
        %v871 = vld [vmem:[%s4] sm:$0xff]
        %v872 = vld [vmem:[%s4 + $0x8] sm:$0xff]
        %v873 = vld [vmem:[%s4 + $0x10] sm:$0xff]
        %v874 = vld [vmem:[%s4 + $0x18] sm:$0xff]
        %v875 = vld [vmem:[%s4 + $0x20] sm:$0xff]
        %v876 = vld [vmem:[%s4 + $0x28] sm:$0xff]
        %v877 = vld [vmem:[%s4 + $0x30] sm:$0xff]
        %v878 = vld [vmem:[%s4 + $0x38] sm:$0xff]
        %v879 = vld [vmem:[%s4 + $0x40] sm:$0xff]
        %v880 = vld [vmem:[%s4 + $0x48] sm:$0xff]
        %v881 = vld [vmem:[%s4 + $0x50] sm:$0xff]
        %v882 = vld [vmem:[%s4 + $0x58] sm:$0xff]
        %v883 = vld [vmem:[%s4 + $0x60] sm:$0xff]
        %v884 = vld [vmem:[%s4 + $0x68] sm:$0xff]
        %v885 = vld [vmem:[%s4 + $0x70] sm:$0xff]
        %v886 = vld [vmem:[%s4 + $0x78] sm:$0xff]
        %v887 = vld [vmem:[%s4 + $0x80] sm:$0xff]
        %v888 = vld [vmem:[%s4 + $0x88] sm:$0xff]
        %v889 = vld [vmem:[%s4 + $0x90] sm:$0xff]
        %v890 = vld [vmem:[%s4 + $0x98] sm:$0xff]
        %v891 = vld [vmem:[%s4 + $0xa0] sm:$0xff]
        %v892 = vld [vmem:[%s4 + $0xa8] sm:$0xff]
        %v893 = vld [vmem:[%s4 + $0xb0] sm:$0xff]
        %v894 = vld [vmem:[%s4 + $0xb8] sm:$0xff]
        %v895 = vld [vmem:[%s4 + $0xc0] sm:$0xff]
        %v896 = vld [vmem:[%s4 + $0xc8] sm:$0xff]
        %v897 = vld [vmem:[%s4 + $0xd0] sm:$0xff]
        %v898 = vld [vmem:[%s4 + $0xd8] sm:$0xff]
        %v899 = vld [vmem:[%s4 + $0xe0] sm:$0xff]
        %v900 = vld [vmem:[%s4 + $0xe8] sm:$0xff]
        %v901 = vld [vmem:[%s4 + $0xf0] sm:$0xff]
        %v902 = vld [vmem:[%s4 + $0xf8] sm:$0xff]
        %v903 = vld [vmem:[%s4 + $0x100] sm:$0xff]
        %v904 = vld [vmem:[%s4 + $0x108] sm:$0xff]
        %v905 = vld [vmem:[%s4 + $0x110] sm:$0xff]
        %v906 = vld [vmem:[%s4 + $0x118] sm:$0xff]
        %v907 = vld [vmem:[%s4 + $0x120] sm:$0xff]
        %v908 = vld [vmem:[%s4 + $0x128] sm:$0xff]
        %v909 = vld [vmem:[%s4 + $0x130] sm:$0xff]
        %v910 = vld [vmem:[%s4 + $0x138] sm:$0xff]
        %v911 = vld [vmem:[%s4 + $0x140] sm:$0xff]
        %v912 = vld [vmem:[%s4 + $0x148] sm:$0xff]
        %v913 = vld [vmem:[%s4 + $0x150] sm:$0xff]
        %v914 = vld [vmem:[%s4 + $0x158] sm:$0xff]
        %v915 = vld [vmem:[%s4 + $0x160] sm:$0xff]
        %v916 = vld [vmem:[%s4 + $0x168] sm:$0xff]
        %v917 = vld [vmem:[%s4 + $0x170] sm:$0xff]
        %v918 = vld [vmem:[%s4 + $0x178] sm:$0xff]
        %v919 = vld [vmem:[%s4 + $0x180] sm:$0xff]
        %v920 = vld [vmem:[%s4 + $0x188] sm:$0xff]
        %v921 = vld [vmem:[%s4 + $0x190] sm:$0xff]
        %v922 = vld [vmem:[%s4 + $0x198] sm:$0xff]
        %v923 = vld [vmem:[%s4 + $0x1a0] sm:$0xff]
        %v924 = vld [vmem:[%s4 + $0x1a8] sm:$0xff]
        %v925 = vld [vmem:[%s4 + $0x1b0] sm:$0xff]
        %v926 = vld [vmem:[%s4 + $0x1b8] sm:$0xff]
        %v927 = vld [vmem:[%s4 + $0x1c0] sm:$0xff]
        %v928 = vld [vmem:[%s4 + $0x1c8] sm:$0xff]
        %v929 = vld [vmem:[%s4 + $0x1d0] sm:$0xff]
        %v930 = vld [vmem:[%s4 + $0x1d8] sm:$0xff]
        %v931 = vld [vmem:[%s4 + $0x1e0] sm:$0xff]
        %v932 = vld [vmem:[%s4 + $0x1e8] sm:$0xff]
        %v933 = vld [vmem:[%s4 + $0x1f0] sm:$0xff]
        %v934 = vld [vmem:[%s4 + $0x1f8] sm:$0xff]
        %v935 = vld [vmem:[%s4 + $0x200] sm:$0xff]
        %v936 = vld [vmem:[%s4 + $0x208] sm:$0xff]
        %v937 = vld [vmem:[%s4 + $0x210] sm:$0xff]
        %v938 = vld [vmem:[%s4 + $0x218] sm:$0xf]
        %940 = vset.pattern.permute.xlu0 0
        %941 = vperm.xlu0 %940, %v871
        %v942 = vpop.permute.xlu0 %941
        %945 = vset.pattern.permute.xlu0 0
        %946 = vperm.xlu0 %945, %v872
        %v947 = vpop.permute.xlu0 %946
        %950 = vset.pattern.permute.xlu0 0
        %951 = vperm.xlu0 %950, %v873
        %v952 = vpop.permute.xlu0 %951
        %955 = vset.pattern.permute.xlu0 0
        %956 = vperm.xlu0 %955, %v874
        %v957 = vpop.permute.xlu0 %956
        %960 = vset.pattern.permute.xlu0 0
        %961 = vperm.xlu0 %960, %v875
        %v962 = vpop.permute.xlu0 %961
        %965 = vset.pattern.permute.xlu0 0
        %966 = vperm.xlu0 %965, %v876
        %v967 = vpop.permute.xlu0 %966
        %970 = vset.pattern.permute.xlu0 0
        %971 = vperm.xlu0 %970, %v877
        %v972 = vpop.permute.xlu0 %971
        %975 = vset.pattern.permute.xlu0 0
        %976 = vperm.xlu0 %975, %v878
        %v977 = vpop.permute.xlu0 %976
        %980 = vset.pattern.permute.xlu0 0
        %981 = vperm.xlu0 %980, %v879
        %v982 = vpop.permute.xlu0 %981
        %985 = vset.pattern.permute.xlu0 0
        %986 = vperm.xlu0 %985, %v880
        %v987 = vpop.permute.xlu0 %986
        %990 = vset.pattern.permute.xlu0 0
        %991 = vperm.xlu0 %990, %v881
        %v992 = vpop.permute.xlu0 %991
        %995 = vset.pattern.permute.xlu0 0
        %996 = vperm.xlu0 %995, %v882
        %v997 = vpop.permute.xlu0 %996
        %1000 = vset.pattern.permute.xlu0 0
        %1001 = vperm.xlu0 %1000, %v883
        %v1002 = vpop.permute.xlu0 %1001
        %1005 = vset.pattern.permute.xlu0 0
        %1006 = vperm.xlu0 %1005, %v884
        %v1007 = vpop.permute.xlu0 %1006
        %1010 = vset.pattern.permute.xlu0 0
        %1011 = vperm.xlu0 %1010, %v885
        %v1012 = vpop.permute.xlu0 %1011
        %1015 = vset.pattern.permute.xlu0 0
        %1016 = vperm.xlu0 %1015, %v886
        %v1017 = vpop.permute.xlu0 %1016
        %1020 = vset.pattern.permute.xlu0 0
        %1021 = vperm.xlu0 %1020, %v887
        %v1022 = vpop.permute.xlu0 %1021
        %1025 = vset.pattern.permute.xlu0 0
        %1026 = vperm.xlu0 %1025, %v888
        %v1027 = vpop.permute.xlu0 %1026
        %1030 = vset.pattern.permute.xlu0 0
        %1031 = vperm.xlu0 %1030, %v889
        %v1032 = vpop.permute.xlu0 %1031
        %1035 = vset.pattern.permute.xlu0 0
        %1036 = vperm.xlu0 %1035, %v890
        %v1037 = vpop.permute.xlu0 %1036
        %1040 = vset.pattern.permute.xlu0 0
        %1041 = vperm.xlu0 %1040, %v891
        %v1042 = vpop.permute.xlu0 %1041
        %1045 = vset.pattern.permute.xlu0 0
        %1046 = vperm.xlu0 %1045, %v892
        %v1047 = vpop.permute.xlu0 %1046
        %1050 = vset.pattern.permute.xlu0 0
        %1051 = vperm.xlu0 %1050, %v893
        %v1052 = vpop.permute.xlu0 %1051
        %1055 = vset.pattern.permute.xlu0 0
        %1056 = vperm.xlu0 %1055, %v894
        %v1057 = vpop.permute.xlu0 %1056
        %1060 = vset.pattern.permute.xlu0 0
        %1061 = vperm.xlu0 %1060, %v895
        %v1062 = vpop.permute.xlu0 %1061
        %1065 = vset.pattern.permute.xlu0 0
        %1066 = vperm.xlu0 %1065, %v896
        %v1067 = vpop.permute.xlu0 %1066
        %1070 = vset.pattern.permute.xlu0 0
        %1071 = vperm.xlu0 %1070, %v897
        %v1072 = vpop.permute.xlu0 %1071
        %1075 = vset.pattern.permute.xlu0 0
        %1076 = vperm.xlu0 %1075, %v898
        %v1077 = vpop.permute.xlu0 %1076
        %1080 = vset.pattern.permute.xlu0 0
        %1081 = vperm.xlu0 %1080, %v899
        %v1082 = vpop.permute.xlu0 %1081
        %1085 = vset.pattern.permute.xlu0 0
        %1086 = vperm.xlu0 %1085, %v900
        %v1087 = vpop.permute.xlu0 %1086
        %1090 = vset.pattern.permute.xlu0 0
        %1091 = vperm.xlu0 %1090, %v901
        %v1092 = vpop.permute.xlu0 %1091
        %1095 = vset.pattern.permute.xlu0 0
        %1096 = vperm.xlu0 %1095, %v902
        %v1097 = vpop.permute.xlu0 %1096
        %1100 = vset.pattern.permute.xlu0 0
        %1101 = vperm.xlu0 %1100, %v903
        %v1102 = vpop.permute.xlu0 %1101
        %1105 = vset.pattern.permute.xlu0 0
        %1106 = vperm.xlu0 %1105, %v904
        %v1107 = vpop.permute.xlu0 %1106
        %1110 = vset.pattern.permute.xlu0 0
        %1111 = vperm.xlu0 %1110, %v905
        %v1112 = vpop.permute.xlu0 %1111
        %1115 = vset.pattern.permute.xlu0 0
        %1116 = vperm.xlu0 %1115, %v906
        %v1117 = vpop.permute.xlu0 %1116
        %1120 = vset.pattern.permute.xlu0 0
        %1121 = vperm.xlu0 %1120, %v907
        %v1122 = vpop.permute.xlu0 %1121
        %1125 = vset.pattern.permute.xlu0 0
        %1126 = vperm.xlu0 %1125, %v908
        %v1127 = vpop.permute.xlu0 %1126
        %1130 = vset.pattern.permute.xlu0 0
        %1131 = vperm.xlu0 %1130, %v909
        %v1132 = vpop.permute.xlu0 %1131
        %1135 = vset.pattern.permute.xlu0 0
        %1136 = vperm.xlu0 %1135, %v910
        %v1137 = vpop.permute.xlu0 %1136
        %1140 = vset.pattern.permute.xlu0 0
        %1141 = vperm.xlu0 %1140, %v911
        %v1142 = vpop.permute.xlu0 %1141
        %1145 = vset.pattern.permute.xlu0 0
        %1146 = vperm.xlu0 %1145, %v912
        %v1147 = vpop.permute.xlu0 %1146
        %1150 = vset.pattern.permute.xlu0 0
        %1151 = vperm.xlu0 %1150, %v913
        %v1152 = vpop.permute.xlu0 %1151
        %1155 = vset.pattern.permute.xlu0 0
        %1156 = vperm.xlu0 %1155, %v914
        %v1157 = vpop.permute.xlu0 %1156
        %1160 = vset.pattern.permute.xlu0 0
        %1161 = vperm.xlu0 %1160, %v915
        %v1162 = vpop.permute.xlu0 %1161
        %1165 = vset.pattern.permute.xlu0 0
        %1166 = vperm.xlu0 %1165, %v916
        %v1167 = vpop.permute.xlu0 %1166
        %1170 = vset.pattern.permute.xlu0 0
        %1171 = vperm.xlu0 %1170, %v917
        %v1172 = vpop.permute.xlu0 %1171
        %1175 = vset.pattern.permute.xlu0 0
        %1176 = vperm.xlu0 %1175, %v918
        %v1177 = vpop.permute.xlu0 %1176
        %1180 = vset.pattern.permute.xlu0 0
        %1181 = vperm.xlu0 %1180, %v919
        %v1182 = vpop.permute.xlu0 %1181
        %1185 = vset.pattern.permute.xlu0 0
        %1186 = vperm.xlu0 %1185, %v920
        %v1187 = vpop.permute.xlu0 %1186
        %1190 = vset.pattern.permute.xlu0 0
        %1191 = vperm.xlu0 %1190, %v921
        %v1192 = vpop.permute.xlu0 %1191
        %1195 = vset.pattern.permute.xlu0 0
        %1196 = vperm.xlu0 %1195, %v922
        %v1197 = vpop.permute.xlu0 %1196
        %1200 = vset.pattern.permute.xlu0 0
        %1201 = vperm.xlu0 %1200, %v923
        %v1202 = vpop.permute.xlu0 %1201
        %1205 = vset.pattern.permute.xlu0 0
        %1206 = vperm.xlu0 %1205, %v924
        %v1207 = vpop.permute.xlu0 %1206
        %1210 = vset.pattern.permute.xlu0 0
        %1211 = vperm.xlu0 %1210, %v925
        %v1212 = vpop.permute.xlu0 %1211
        %1215 = vset.pattern.permute.xlu0 0
        %1216 = vperm.xlu0 %1215, %v926
        %v1217 = vpop.permute.xlu0 %1216
        %1220 = vset.pattern.permute.xlu0 0
        %1221 = vperm.xlu0 %1220, %v927
        %v1222 = vpop.permute.xlu0 %1221
        %1225 = vset.pattern.permute.xlu0 0
        %1226 = vperm.xlu0 %1225, %v928
        %v1227 = vpop.permute.xlu0 %1226
        %1230 = vset.pattern.permute.xlu0 0
        %1231 = vperm.xlu0 %1230, %v929
        %v1232 = vpop.permute.xlu0 %1231
        %1235 = vset.pattern.permute.xlu0 0
        %1236 = vperm.xlu0 %1235, %v930
        %v1237 = vpop.permute.xlu0 %1236
        %1240 = vset.pattern.permute.xlu0 0
        %1241 = vperm.xlu0 %1240, %v931
        %v1242 = vpop.permute.xlu0 %1241
        %1245 = vset.pattern.permute.xlu0 0
        %1246 = vperm.xlu0 %1245, %v932
        %v1247 = vpop.permute.xlu0 %1246
        %1250 = vset.pattern.permute.xlu0 0
        %1251 = vperm.xlu0 %1250, %v933
        %v1252 = vpop.permute.xlu0 %1251
        %1255 = vset.pattern.permute.xlu0 0
        %1256 = vperm.xlu0 %1255, %v934
        %v1257 = vpop.permute.xlu0 %1256
        %1260 = vset.pattern.permute.xlu0 0
        %1261 = vperm.xlu0 %1260, %v935
        %v1262 = vpop.permute.xlu0 %1261
        %1265 = vset.pattern.permute.xlu0 0
        %1266 = vperm.xlu0 %1265, %v936
        %v1267 = vpop.permute.xlu0 %1266
        %1270 = vset.pattern.permute.xlu0 0
        %1271 = vperm.xlu0 %1270, %v937
        %v1272 = vpop.permute.xlu0 %1271
        %1275 = vset.pattern.permute.xlu0 0
        %1276 = vperm.xlu0 %1275, %v938
        %v1277 = vpop.permute.xlu0 %1276
        %vm1279 = vcmask 261120
        %v1281 = vsel %vm1279, %v803, 0
        %v1284 = vsel %vm1279, %v804, 0
        %v1287 = vsel %vm1279, %v805, 0
        %v1290 = vsel %vm1279, %v806, 0
        %v1293 = vsel %vm1279, %v807, 0
        %v1296 = vsel %vm1279, %v808, 0
        %v1299 = vsel %vm1279, %v809, 0
        %v1302 = vsel %vm1279, %v810, 0
        %v1305 = vsel %vm1279, %v811, 0
        %v1308 = vsel %vm1279, %v812, 0
        %v1311 = vsel %vm1279, %v813, 0
        %v1314 = vsel %vm1279, %v814, 0
        %v1317 = vsel %vm1279, %v815, 0
        %v1320 = vsel %vm1279, %v816, 0
        %v1323 = vsel %vm1279, %v817, 0
        %v1326 = vsel %vm1279, %v818, 0
        %v1329 = vsel %vm1279, %v819, 0
        %v1332 = vsel %vm1279, %v820, 0
        %v1335 = vsel %vm1279, %v821, 0
        %v1338 = vsel %vm1279, %v822, 0
        %v1341 = vsel %vm1279, %v823, 0
        %v1344 = vsel %vm1279, %v824, 0
        %v1347 = vsel %vm1279, %v825, 0
        %v1350 = vsel %vm1279, %v826, 0
        %v1353 = vsel %vm1279, %v827, 0
        %v1356 = vsel %vm1279, %v828, 0
        %v1359 = vsel %vm1279, %v829, 0
        %v1362 = vsel %vm1279, %v830, 0
        %v1365 = vsel %vm1279, %v831, 0
        %v1368 = vsel %vm1279, %v832, 0
        %v1371 = vsel %vm1279, %v833, 0
        %v1374 = vsel %vm1279, %v834, 0
        %v1377 = vsel %vm1279, %v835, 0
        %v1380 = vsel %vm1279, %v836, 0
        %v1383 = vsel %vm1279, %v837, 0
        %v1386 = vsel %vm1279, %v838, 0
        %v1389 = vsel %vm1279, %v839, 0
        %v1392 = vsel %vm1279, %v840, 0
        %v1395 = vsel %vm1279, %v841, 0
        %v1398 = vsel %vm1279, %v842, 0
        %v1401 = vsel %vm1279, %v843, 0
        %v1404 = vsel %vm1279, %v844, 0
        %v1407 = vsel %vm1279, %v845, 0
        %v1410 = vsel %vm1279, %v846, 0
        %v1413 = vsel %vm1279, %v847, 0
        %v1416 = vsel %vm1279, %v848, 0
        %v1419 = vsel %vm1279, %v849, 0
        %v1422 = vsel %vm1279, %v850, 0
        %v1425 = vsel %vm1279, %v851, 0
        %v1428 = vsel %vm1279, %v852, 0
        %v1431 = vsel %vm1279, %v853, 0
        %v1434 = vsel %vm1279, %v854, 0
        %v1437 = vsel %vm1279, %v855, 0
        %v1440 = vsel %vm1279, %v856, 0
        %v1443 = vsel %vm1279, %v857, 0
        %v1446 = vsel %vm1279, %v858, 0
        %v1449 = vsel %vm1279, %v859, 0
        %v1452 = vsel %vm1279, %v860, 0
        %v1455 = vsel %vm1279, %v861, 0
        %v1458 = vsel %vm1279, %v862, 0
        %v1461 = vsel %vm1279, %v863, 0
        %v1464 = vsel %vm1279, %v864, 0
        %v1467 = vsel %vm1279, %v865, 0
        %v1470 = vsel %vm1279, %v866, 0
        %v1473 = vsel %vm1279, %v867, 0
        %v1476 = vsel %vm1279, %v868, 0
        %v1479 = vsel %vm1279, %v869, 0
        %v1482 = vsel %vm1279, %v870, 0
        %1484 = vmatprep.subr.mxu0 0.0
        %1485 = vmatpush1.msra.mxu0 0.0
        %1486 = vmatprep.subr.mxu0 0.0
        %1487 = vmatpush1.msra.mxu0 0.0
        %1488 = vmatprep.subr.mxu0 0.0
        %1489 = vmatpush1.msra.mxu0 0.0
        %1490 = vmatprep.subr.mxu0 0.0
        %1491 = vmatpush1.msra.mxu0 0.0
        %1492 = vmatprep.subr.mxu0 0.0
        %1493 = vmatpush1.msra.mxu0 0.0
        %1494 = vmatprep.subr.mxu0 0.0
        %1495 = vmatpush1.msra.mxu0 0.0
        %1496 = vmatprep.subr.mxu0 0.0
        %1497 = vmatpush1.msra.mxu0 0.0
        %1498 = vmatprep.subr.mxu0 0.0
        %1499 = vmatpush1.msra.mxu0 0.0
        %1500 = vmatprep.subr.mxu0 0.0
        %1501 = vmatpush1.msra.mxu0 0.0
        %1502 = vmatprep.subr.mxu0 0.0
        %1503 = vmatpush1.msra.mxu0 0.0
        %1504 = vmatprep.subr.mxu0 0.0
        %1505 = vmatpush1.msra.mxu0 0.0
        %1506 = vmatprep.subr.mxu0 0.0
        %1507 = vmatpush1.msra.mxu0 0.0
        %1508 = vmatprep.subr.mxu0 0.0
        %1509 = vmatpush1.msra.mxu0 %v802
        %1510 = vmatprep.subr.mxu0 0.0
        %1511 = vmatpush1.msra.mxu0 %v801
        %1512 = vmatprep.subr.mxu0 0.0
        %1513 = vmatpush1.msra.mxu0 %v800
        %1514 = vmatprep.subr.mxu0 0.0
        %1515 = vmatpush1.msra.mxu0 %v799
        %1516 = vmatprep.subr.mxu0 0.0
        %1517 = vmatpush2.msra.mxu0 0.0
        %1518 = vmatprep.subr.mxu0 0.0
        %1519 = vmatpush2.msra.mxu0 0.0
        %1520 = vmatprep.subr.mxu0 0.0
        %1521 = vmatpush2.msra.mxu0 0.0
        %1522 = vmatprep.subr.mxu0 0.0
        %1523 = vmatpush2.msra.mxu0 0.0
        %1524 = vmatprep.subr.mxu0 0.0
        %1525 = vmatpush2.msra.mxu0 0.0
        %1526 = vmatprep.subr.mxu0 0.0
        %1527 = vmatpush2.msra.mxu0 0.0
        %1528 = vmatprep.subr.mxu0 0.0
        %1529 = vmatpush2.msra.mxu0 0.0
        %1530 = vmatprep.subr.mxu0 0.0
        %1531 = vmatpush2.msra.mxu0 0.0
        %1532 = vmatprep.subr.mxu0 0.0
        %1533 = vmatpush2.msra.mxu0 0.0
        %1534 = vmatprep.subr.mxu0 0.0
        %1535 = vmatpush2.msra.mxu0 0.0
        %1536 = vmatprep.subr.mxu0 0.0
        %1537 = vmatpush2.msra.mxu0 0.0
        %1538 = vmatprep.subr.mxu0 0.0
        %1539 = vmatpush2.msra.mxu0 0.0
        %1540 = vmatprep.subr.mxu0 0.0
        %1541 = vmatpush2.msra.mxu0 0.0
        %1542 = vmatprep.subr.mxu0 0.0
        %1543 = vmatpush2.msra.mxu0 0.0
        %1544 = vmatprep.subr.mxu0 0.0
        %1545 = vmatpush2.msra.mxu0 0.0
        %1546 = vmatprep.subr.mxu0 0.0
        %1547 = vmatpush2.msra.mxu0 0.0
        %1548 = vmatprep.mubr.f32.mxu0 0.0
        %1549 = vmatmul.mubr.f32.gmra.mxu0 %v1281
        %v1550 = vpop.f32.mrf.mxu0
        %v1551 = vadd.f32 %v942, %v1550
        %v1552 = vpop.f32.mrf.mxu0
        %1553 = vmatprep.mubr.f32.mxu0 0.0
        %1554 = vmatmul.mubr.f32.gmra.mxu0 %v1284
        %v1555 = vpop.f32.mrf.mxu0
        %v1556 = vadd.f32 %v947, %v1555
        %v1557 = vpop.f32.mrf.mxu0
        %1558 = vmatprep.mubr.f32.mxu0 0.0
        %1559 = vmatmul.mubr.f32.gmra.mxu0 %v1287
        %v1560 = vpop.f32.mrf.mxu0
        %v1561 = vadd.f32 %v952, %v1560
        %v1562 = vpop.f32.mrf.mxu0
        %1563 = vmatprep.mubr.f32.mxu0 0.0
        %1564 = vmatmul.mubr.f32.gmra.mxu0 %v1290
        %v1565 = vpop.f32.mrf.mxu0
        %v1566 = vadd.f32 %v957, %v1565
        %v1567 = vpop.f32.mrf.mxu0
        %1568 = vmatprep.mubr.f32.mxu0 0.0
        %1569 = vmatmul.mubr.f32.gmra.mxu0 %v1293
        %v1570 = vpop.f32.mrf.mxu0
        %v1571 = vadd.f32 %v962, %v1570
        %v1572 = vpop.f32.mrf.mxu0
        %1573 = vmatprep.mubr.f32.mxu0 0.0
        %1574 = vmatmul.mubr.f32.gmra.mxu0 %v1296
        %v1575 = vpop.f32.mrf.mxu0
        %v1576 = vadd.f32 %v967, %v1575
        %v1577 = vpop.f32.mrf.mxu0
        %1578 = vmatprep.mubr.f32.mxu0 0.0
        %1579 = vmatmul.mubr.f32.gmra.mxu0 %v1299
        %v1580 = vpop.f32.mrf.mxu0
        %v1581 = vadd.f32 %v972, %v1580
        %v1582 = vpop.f32.mrf.mxu0
        %1583 = vmatprep.mubr.f32.mxu0 0.0
        %1584 = vmatmul.mubr.f32.gmra.mxu0 %v1302
        %v1585 = vpop.f32.mrf.mxu0
        %v1586 = vadd.f32 %v977, %v1585
        %v1587 = vpop.f32.mrf.mxu0
        %1588 = vmatprep.mubr.f32.mxu0 0.0
        %1589 = vmatmul.mubr.f32.gmra.mxu0 %v1305
        %v1590 = vpop.f32.mrf.mxu0
        %v1591 = vadd.f32 %v982, %v1590
        %v1592 = vpop.f32.mrf.mxu0
        %1593 = vmatprep.mubr.f32.mxu0 0.0
        %1594 = vmatmul.mubr.f32.gmra.mxu0 %v1308
        %v1595 = vpop.f32.mrf.mxu0
        %v1596 = vadd.f32 %v987, %v1595
        %v1597 = vpop.f32.mrf.mxu0
        %1598 = vmatprep.mubr.f32.mxu0 0.0
        %1599 = vmatmul.mubr.f32.gmra.mxu0 %v1311
        %v1600 = vpop.f32.mrf.mxu0
        %v1601 = vadd.f32 %v992, %v1600
        %v1602 = vpop.f32.mrf.mxu0
        %1603 = vmatprep.mubr.f32.mxu0 0.0
        %1604 = vmatmul.mubr.f32.gmra.mxu0 %v1314
        %v1605 = vpop.f32.mrf.mxu0
        %v1606 = vadd.f32 %v997, %v1605
        %v1607 = vpop.f32.mrf.mxu0
        %1608 = vmatprep.mubr.f32.mxu0 0.0
        %1609 = vmatmul.mubr.f32.gmra.mxu0 %v1317
        %v1610 = vpop.f32.mrf.mxu0
        %v1611 = vadd.f32 %v1002, %v1610
        %v1612 = vpop.f32.mrf.mxu0
        %1613 = vmatprep.mubr.f32.mxu0 0.0
        %1614 = vmatmul.mubr.f32.gmra.mxu0 %v1320
        %v1615 = vpop.f32.mrf.mxu0
        %v1616 = vadd.f32 %v1007, %v1615
        %v1617 = vpop.f32.mrf.mxu0
        %1618 = vmatprep.mubr.f32.mxu0 0.0
        %1619 = vmatmul.mubr.f32.gmra.mxu0 %v1323
        %v1620 = vpop.f32.mrf.mxu0
        %v1621 = vadd.f32 %v1012, %v1620
        %v1622 = vpop.f32.mrf.mxu0
        %1623 = vmatprep.mubr.f32.mxu0 0.0
        %1624 = vmatmul.mubr.f32.gmra.mxu0 %v1326
        %v1625 = vpop.f32.mrf.mxu0
        %v1626 = vadd.f32 %v1017, %v1625
        %v1627 = vpop.f32.mrf.mxu0
        %1628 = vmatprep.mubr.f32.mxu0 0.0
        %1629 = vmatmul.mubr.f32.gmra.mxu0 %v1329
        %v1630 = vpop.f32.mrf.mxu0
        %v1631 = vadd.f32 %v1022, %v1630
        %v1632 = vpop.f32.mrf.mxu0
        %1633 = vmatprep.mubr.f32.mxu0 0.0
        %1634 = vmatmul.mubr.f32.gmra.mxu0 %v1332
        %v1635 = vpop.f32.mrf.mxu0
        %v1636 = vadd.f32 %v1027, %v1635
        %v1637 = vpop.f32.mrf.mxu0
        %1638 = vmatprep.mubr.f32.mxu0 0.0
        %1639 = vmatmul.mubr.f32.gmra.mxu0 %v1335
        %v1640 = vpop.f32.mrf.mxu0
        %v1641 = vadd.f32 %v1032, %v1640
        %v1642 = vpop.f32.mrf.mxu0
        %1643 = vmatprep.mubr.f32.mxu0 0.0
        %1644 = vmatmul.mubr.f32.gmra.mxu0 %v1338
        %v1645 = vpop.f32.mrf.mxu0
        %v1646 = vadd.f32 %v1037, %v1645
        %v1647 = vpop.f32.mrf.mxu0
        %1648 = vmatprep.mubr.f32.mxu0 0.0
        %1649 = vmatmul.mubr.f32.gmra.mxu0 %v1341
        %v1650 = vpop.f32.mrf.mxu0
        %v1651 = vadd.f32 %v1042, %v1650
        %v1652 = vpop.f32.mrf.mxu0
        %1653 = vmatprep.mubr.f32.mxu0 0.0
        %1654 = vmatmul.mubr.f32.gmra.mxu0 %v1344
        %v1655 = vpop.f32.mrf.mxu0
        %v1656 = vadd.f32 %v1047, %v1655
        %v1657 = vpop.f32.mrf.mxu0
        %1658 = vmatprep.mubr.f32.mxu0 0.0
        %1659 = vmatmul.mubr.f32.gmra.mxu0 %v1347
        %v1660 = vpop.f32.mrf.mxu0
        %v1661 = vadd.f32 %v1052, %v1660
        %v1662 = vpop.f32.mrf.mxu0
        %1663 = vmatprep.mubr.f32.mxu0 0.0
        %1664 = vmatmul.mubr.f32.gmra.mxu0 %v1350
        %v1665 = vpop.f32.mrf.mxu0
        %v1666 = vadd.f32 %v1057, %v1665
        %v1667 = vpop.f32.mrf.mxu0
        %1668 = vmatprep.mubr.f32.mxu0 0.0
        %1669 = vmatmul.mubr.f32.gmra.mxu0 %v1353
        %v1670 = vpop.f32.mrf.mxu0
        %v1671 = vadd.f32 %v1062, %v1670
        %v1672 = vpop.f32.mrf.mxu0
        %1673 = vmatprep.mubr.f32.mxu0 0.0
        %1674 = vmatmul.mubr.f32.gmra.mxu0 %v1356
        %v1675 = vpop.f32.mrf.mxu0
        %v1676 = vadd.f32 %v1067, %v1675
        %v1677 = vpop.f32.mrf.mxu0
        %1678 = vmatprep.mubr.f32.mxu0 0.0
        %1679 = vmatmul.mubr.f32.gmra.mxu0 %v1359
        %v1680 = vpop.f32.mrf.mxu0
        %v1681 = vadd.f32 %v1072, %v1680
        %v1682 = vpop.f32.mrf.mxu0
        %1683 = vmatprep.mubr.f32.mxu0 0.0
        %1684 = vmatmul.mubr.f32.gmra.mxu0 %v1362
        %v1685 = vpop.f32.mrf.mxu0
        %v1686 = vadd.f32 %v1077, %v1685
        %v1687 = vpop.f32.mrf.mxu0
        %1688 = vmatprep.mubr.f32.mxu0 0.0
        %1689 = vmatmul.mubr.f32.gmra.mxu0 %v1365
        %v1690 = vpop.f32.mrf.mxu0
        %v1691 = vadd.f32 %v1082, %v1690
        %v1692 = vpop.f32.mrf.mxu0
        %1693 = vmatprep.mubr.f32.mxu0 0.0
        %1694 = vmatmul.mubr.f32.gmra.mxu0 %v1368
        %v1695 = vpop.f32.mrf.mxu0
        %v1696 = vadd.f32 %v1087, %v1695
        %v1697 = vpop.f32.mrf.mxu0
        %1698 = vmatprep.mubr.f32.mxu0 0.0
        %1699 = vmatmul.mubr.f32.gmra.mxu0 %v1371
        %v1700 = vpop.f32.mrf.mxu0
        %v1701 = vadd.f32 %v1092, %v1700
        %v1702 = vpop.f32.mrf.mxu0
        %1703 = vmatprep.mubr.f32.mxu0 0.0
        %1704 = vmatmul.mubr.f32.gmra.mxu0 %v1374
        %v1705 = vpop.f32.mrf.mxu0
        %v1706 = vadd.f32 %v1097, %v1705
        %v1707 = vpop.f32.mrf.mxu0
        %1708 = vmatprep.mubr.f32.mxu0 0.0
        %1709 = vmatmul.mubr.f32.gmra.mxu0 %v1377
        %v1710 = vpop.f32.mrf.mxu0
        %v1711 = vadd.f32 %v1102, %v1710
        %v1712 = vpop.f32.mrf.mxu0
        %1713 = vmatprep.mubr.f32.mxu0 0.0
        %1714 = vmatmul.mubr.f32.gmra.mxu0 %v1380
        %v1715 = vpop.f32.mrf.mxu0
        %v1716 = vadd.f32 %v1107, %v1715
        %v1717 = vpop.f32.mrf.mxu0
        %1718 = vmatprep.mubr.f32.mxu0 0.0
        %1719 = vmatmul.mubr.f32.gmra.mxu0 %v1383
        %v1720 = vpop.f32.mrf.mxu0
        %v1721 = vadd.f32 %v1112, %v1720
        %v1722 = vpop.f32.mrf.mxu0
        %1723 = vmatprep.mubr.f32.mxu0 0.0
        %1724 = vmatmul.mubr.f32.gmra.mxu0 %v1386
        %v1725 = vpop.f32.mrf.mxu0
        %v1726 = vadd.f32 %v1117, %v1725
        %v1727 = vpop.f32.mrf.mxu0
        %1728 = vmatprep.mubr.f32.mxu0 0.0
        %1729 = vmatmul.mubr.f32.gmra.mxu0 %v1389
        %v1730 = vpop.f32.mrf.mxu0
        %v1731 = vadd.f32 %v1122, %v1730
        %v1732 = vpop.f32.mrf.mxu0
        %1733 = vmatprep.mubr.f32.mxu0 0.0
        %1734 = vmatmul.mubr.f32.gmra.mxu0 %v1392
        %v1735 = vpop.f32.mrf.mxu0
        %v1736 = vadd.f32 %v1127, %v1735
        %v1737 = vpop.f32.mrf.mxu0
        %1738 = vmatprep.mubr.f32.mxu0 0.0
        %1739 = vmatmul.mubr.f32.gmra.mxu0 %v1395
        %v1740 = vpop.f32.mrf.mxu0
        %v1741 = vadd.f32 %v1132, %v1740
        %v1742 = vpop.f32.mrf.mxu0
        %1743 = vmatprep.mubr.f32.mxu0 0.0
        %1744 = vmatmul.mubr.f32.gmra.mxu0 %v1398
        %v1745 = vpop.f32.mrf.mxu0
        %v1746 = vadd.f32 %v1137, %v1745
        %v1747 = vpop.f32.mrf.mxu0
        %1748 = vmatprep.mubr.f32.mxu0 0.0
        %1749 = vmatmul.mubr.f32.gmra.mxu0 %v1401
        %v1750 = vpop.f32.mrf.mxu0
        %v1751 = vadd.f32 %v1142, %v1750
        %v1752 = vpop.f32.mrf.mxu0
        %1753 = vmatprep.mubr.f32.mxu0 0.0
        %1754 = vmatmul.mubr.f32.gmra.mxu0 %v1404
        %v1755 = vpop.f32.mrf.mxu0
        %v1756 = vadd.f32 %v1147, %v1755
        %v1757 = vpop.f32.mrf.mxu0
        %1758 = vmatprep.mubr.f32.mxu0 0.0
        %1759 = vmatmul.mubr.f32.gmra.mxu0 %v1407
        %v1760 = vpop.f32.mrf.mxu0
        %v1761 = vadd.f32 %v1152, %v1760
        %v1762 = vpop.f32.mrf.mxu0
        %1763 = vmatprep.mubr.f32.mxu0 0.0
        %1764 = vmatmul.mubr.f32.gmra.mxu0 %v1410
        %v1765 = vpop.f32.mrf.mxu0
        %v1766 = vadd.f32 %v1157, %v1765
        %v1767 = vpop.f32.mrf.mxu0
        %1768 = vmatprep.mubr.f32.mxu0 0.0
        %1769 = vmatmul.mubr.f32.gmra.mxu0 %v1413
        %v1770 = vpop.f32.mrf.mxu0
        %v1771 = vadd.f32 %v1162, %v1770
        %v1772 = vpop.f32.mrf.mxu0
        %1773 = vmatprep.mubr.f32.mxu0 0.0
        %1774 = vmatmul.mubr.f32.gmra.mxu0 %v1416
        %v1775 = vpop.f32.mrf.mxu0
        %v1776 = vadd.f32 %v1167, %v1775
        %v1777 = vpop.f32.mrf.mxu0
        %1778 = vmatprep.mubr.f32.mxu0 0.0
        %1779 = vmatmul.mubr.f32.gmra.mxu0 %v1419
        %v1780 = vpop.f32.mrf.mxu0
        %v1781 = vadd.f32 %v1172, %v1780
        %v1782 = vpop.f32.mrf.mxu0
        %1783 = vmatprep.mubr.f32.mxu0 0.0
        %1784 = vmatmul.mubr.f32.gmra.mxu0 %v1422
        %v1785 = vpop.f32.mrf.mxu0
        %v1786 = vadd.f32 %v1177, %v1785
        %v1787 = vpop.f32.mrf.mxu0
        %1788 = vmatprep.mubr.f32.mxu0 0.0
        %1789 = vmatmul.mubr.f32.gmra.mxu0 %v1425
        %v1790 = vpop.f32.mrf.mxu0
        %v1791 = vadd.f32 %v1182, %v1790
        %v1792 = vpop.f32.mrf.mxu0
        %1793 = vmatprep.mubr.f32.mxu0 0.0
        %1794 = vmatmul.mubr.f32.gmra.mxu0 %v1428
        %v1795 = vpop.f32.mrf.mxu0
        %v1796 = vadd.f32 %v1187, %v1795
        %v1797 = vpop.f32.mrf.mxu0
        %1798 = vmatprep.mubr.f32.mxu0 0.0
        %1799 = vmatmul.mubr.f32.gmra.mxu0 %v1431
        %v1800 = vpop.f32.mrf.mxu0
        %v1801 = vadd.f32 %v1192, %v1800
        %v1802 = vpop.f32.mrf.mxu0
        %1803 = vmatprep.mubr.f32.mxu0 0.0
        %1804 = vmatmul.mubr.f32.gmra.mxu0 %v1434
        %v1805 = vpop.f32.mrf.mxu0
        %v1806 = vadd.f32 %v1197, %v1805
        %v1807 = vpop.f32.mrf.mxu0
        %1808 = vmatprep.mubr.f32.mxu0 0.0
        %1809 = vmatmul.mubr.f32.gmra.mxu0 %v1437
        %v1810 = vpop.f32.mrf.mxu0
        %v1811 = vadd.f32 %v1202, %v1810
        %v1812 = vpop.f32.mrf.mxu0
        %1813 = vmatprep.mubr.f32.mxu0 0.0
        %1814 = vmatmul.mubr.f32.gmra.mxu0 %v1440
        %v1815 = vpop.f32.mrf.mxu0
        %v1816 = vadd.f32 %v1207, %v1815
        %v1817 = vpop.f32.mrf.mxu0
        %1818 = vmatprep.mubr.f32.mxu0 0.0
        %1819 = vmatmul.mubr.f32.gmra.mxu0 %v1443
        %v1820 = vpop.f32.mrf.mxu0
        %v1821 = vadd.f32 %v1212, %v1820
        %v1822 = vpop.f32.mrf.mxu0
        %1823 = vmatprep.mubr.f32.mxu0 0.0
        %1824 = vmatmul.mubr.f32.gmra.mxu0 %v1446
        %v1825 = vpop.f32.mrf.mxu0
        %v1826 = vadd.f32 %v1217, %v1825
        %v1827 = vpop.f32.mrf.mxu0
        %1828 = vmatprep.mubr.f32.mxu0 0.0
        %1829 = vmatmul.mubr.f32.gmra.mxu0 %v1449
        %v1830 = vpop.f32.mrf.mxu0
        %v1831 = vadd.f32 %v1222, %v1830
        %v1832 = vpop.f32.mrf.mxu0
        %1833 = vmatprep.mubr.f32.mxu0 0.0
        %1834 = vmatmul.mubr.f32.gmra.mxu0 %v1452
        %v1835 = vpop.f32.mrf.mxu0
        %v1836 = vadd.f32 %v1227, %v1835
        %v1837 = vpop.f32.mrf.mxu0
        %1838 = vmatprep.mubr.f32.mxu0 0.0
        %1839 = vmatmul.mubr.f32.gmra.mxu0 %v1455
        %v1840 = vpop.f32.mrf.mxu0
        %v1841 = vadd.f32 %v1232, %v1840
        %v1842 = vpop.f32.mrf.mxu0
        %1843 = vmatprep.mubr.f32.mxu0 0.0
        %1844 = vmatmul.mubr.f32.gmra.mxu0 %v1458
        %v1845 = vpop.f32.mrf.mxu0
        %v1846 = vadd.f32 %v1237, %v1845
        %v1847 = vpop.f32.mrf.mxu0
        %1848 = vmatprep.mubr.f32.mxu0 0.0
        %1849 = vmatmul.mubr.f32.gmra.mxu0 %v1461
        %v1850 = vpop.f32.mrf.mxu0
        %v1851 = vadd.f32 %v1242, %v1850
        %v1852 = vpop.f32.mrf.mxu0
        %1853 = vmatprep.mubr.f32.mxu0 0.0
        %1854 = vmatmul.mubr.f32.gmra.mxu0 %v1464
        %v1855 = vpop.f32.mrf.mxu0
        %v1856 = vadd.f32 %v1247, %v1855
        %v1857 = vpop.f32.mrf.mxu0
        %1858 = vmatprep.mubr.f32.mxu0 0.0
        %1859 = vmatmul.mubr.f32.gmra.mxu0 %v1467
        %v1860 = vpop.f32.mrf.mxu0
        %v1861 = vadd.f32 %v1252, %v1860
        %v1862 = vpop.f32.mrf.mxu0
        %1863 = vmatprep.mubr.f32.mxu0 0.0
        %1864 = vmatmul.mubr.f32.gmra.mxu0 %v1470
        %v1865 = vpop.f32.mrf.mxu0
        %v1866 = vadd.f32 %v1257, %v1865
        %v1867 = vpop.f32.mrf.mxu0
        %1868 = vmatprep.mubr.f32.mxu0 0.0
        %1869 = vmatmul.mubr.f32.gmra.mxu0 %v1473
        %v1870 = vpop.f32.mrf.mxu0
        %v1871 = vadd.f32 %v1262, %v1870
        %v1872 = vpop.f32.mrf.mxu0
        %1873 = vmatprep.mubr.f32.mxu0 0.0
        %1874 = vmatmul.mubr.f32.gmra.mxu0 %v1476
        %v1875 = vpop.f32.mrf.mxu0
        %v1876 = vadd.f32 %v1267, %v1875
        %v1877 = vpop.f32.mrf.mxu0
        %1878 = vmatprep.mubr.f32.mxu0 0.0
        %1879 = vmatmul.mubr.f32.gmra.mxu0 %v1479
        %v1880 = vpop.f32.mrf.mxu0
        %v1881 = vadd.f32 %v1272, %v1880
        %v1882 = vpop.f32.mrf.mxu0
        %1883 = vmatprep.mubr.f32.mxu0 0.0
        %1884 = vmatmul.mubr.f32.gmra.mxu0 %v1482
        %v1885 = vpop.f32.mrf.mxu0
        %v1886 = vadd.f32 %v1277, %v1885
        %v1887 = vpop.f32.mrf.mxu0
        %1888 = vdwg.mxu0
        %1889 = vst [vmem:[%s507] sm:$0xff] %v1551
        %1890 = vst [vmem:[%s507 + $0x8] sm:$0xff] %v1556
        %1891 = vst [vmem:[%s507 + $0x10] sm:$0xff] %v1561
        %1892 = vst [vmem:[%s507 + $0x18] sm:$0xff] %v1566
        %1893 = vst [vmem:[%s507 + $0x20] sm:$0xff] %v1571
        %1894 = vst [vmem:[%s507 + $0x28] sm:$0xff] %v1576
        %1895 = vst [vmem:[%s507 + $0x30] sm:$0xff] %v1581
        %1896 = vst [vmem:[%s507 + $0x38] sm:$0xff] %v1586
        %1897 = vst [vmem:[%s507 + $0x40] sm:$0xff] %v1591
        %1898 = vst [vmem:[%s507 + $0x48] sm:$0xff] %v1596
        %1899 = vst [vmem:[%s507 + $0x50] sm:$0xff] %v1601
        %1900 = vst [vmem:[%s507 + $0x58] sm:$0xff] %v1606
        %1901 = vst [vmem:[%s507 + $0x60] sm:$0xff] %v1611
        %1902 = vst [vmem:[%s507 + $0x68] sm:$0xff] %v1616
        %1903 = vst [vmem:[%s507 + $0x70] sm:$0xff] %v1621
        %1904 = vst [vmem:[%s507 + $0x78] sm:$0xff] %v1626
        %1905 = vst [vmem:[%s507 + $0x80] sm:$0xff] %v1631
        %1906 = vst [vmem:[%s507 + $0x88] sm:$0xff] %v1636
        %1907 = vst [vmem:[%s507 + $0x90] sm:$0xff] %v1641
        %1908 = vst [vmem:[%s507 + $0x98] sm:$0xff] %v1646
        %1909 = vst [vmem:[%s507 + $0xa0] sm:$0xff] %v1651
        %1910 = vst [vmem:[%s507 + $0xa8] sm:$0xff] %v1656
        %1911 = vst [vmem:[%s507 + $0xb0] sm:$0xff] %v1661
        %1912 = vst [vmem:[%s507 + $0xb8] sm:$0xff] %v1666
        %1913 = vst [vmem:[%s507 + $0xc0] sm:$0xff] %v1671
        %1914 = vst [vmem:[%s507 + $0xc8] sm:$0xff] %v1676
        %1915 = vst [vmem:[%s507 + $0xd0] sm:$0xff] %v1681
        %1916 = vst [vmem:[%s507 + $0xd8] sm:$0xff] %v1686
        %1917 = vst [vmem:[%s507 + $0xe0] sm:$0xff] %v1691
        %1918 = vst [vmem:[%s507 + $0xe8] sm:$0xff] %v1696
        %1919 = vst [vmem:[%s507 + $0xf0] sm:$0xff] %v1701
        %1920 = vst [vmem:[%s507 + $0xf8] sm:$0xff] %v1706
        %1921 = vst [vmem:[%s507 + $0x100] sm:$0xff] %v1711
        %1922 = vst [vmem:[%s507 + $0x108] sm:$0xff] %v1716
        %1923 = vst [vmem:[%s507 + $0x110] sm:$0xff] %v1721
        %1924 = vst [vmem:[%s507 + $0x118] sm:$0xff] %v1726
        %1925 = vst [vmem:[%s507 + $0x120] sm:$0xff] %v1731
        %1926 = vst [vmem:[%s507 + $0x128] sm:$0xff] %v1736
        %1927 = vst [vmem:[%s507 + $0x130] sm:$0xff] %v1741
        %1928 = vst [vmem:[%s507 + $0x138] sm:$0xff] %v1746
        %1929 = vst [vmem:[%s507 + $0x140] sm:$0xff] %v1751
        %1930 = vst [vmem:[%s507 + $0x148] sm:$0xff] %v1756
        %1931 = vst [vmem:[%s507 + $0x150] sm:$0xff] %v1761
        %1932 = vst [vmem:[%s507 + $0x158] sm:$0xff] %v1766
        %1933 = vst [vmem:[%s507 + $0x160] sm:$0xff] %v1771
        %1934 = vst [vmem:[%s507 + $0x168] sm:$0xff] %v1776
        %1935 = vst [vmem:[%s507 + $0x170] sm:$0xff] %v1781
        %1936 = vst [vmem:[%s507 + $0x178] sm:$0xff] %v1786
        %1937 = vst [vmem:[%s507 + $0x180] sm:$0xff] %v1791
        %1938 = vst [vmem:[%s507 + $0x188] sm:$0xff] %v1796
        %1939 = vst [vmem:[%s507 + $0x190] sm:$0xff] %v1801
        %1940 = vst [vmem:[%s507 + $0x198] sm:$0xff] %v1806
        %1941 = vst [vmem:[%s507 + $0x1a0] sm:$0xff] %v1811
        %1942 = vst [vmem:[%s507 + $0x1a8] sm:$0xff] %v1816
        %1943 = vst [vmem:[%s507 + $0x1b0] sm:$0xff] %v1821
        %1944 = vst [vmem:[%s507 + $0x1b8] sm:$0xff] %v1826
        %1945 = vst [vmem:[%s507 + $0x1c0] sm:$0xff] %v1831
        %1946 = vst [vmem:[%s507 + $0x1c8] sm:$0xff] %v1836
        %1947 = vst [vmem:[%s507 + $0x1d0] sm:$0xff] %v1841
        %1948 = vst [vmem:[%s507 + $0x1d8] sm:$0xff] %v1846
        %1949 = vst [vmem:[%s507 + $0x1e0] sm:$0xff] %v1851
        %1950 = vst [vmem:[%s507 + $0x1e8] sm:$0xff] %v1856
        %1951 = vst [vmem:[%s507 + $0x1f0] sm:$0xff] %v1861
        %1952 = vst [vmem:[%s507 + $0x1f8] sm:$0xff] %v1866
        %1953 = vst [vmem:[%s507 + $0x200] sm:$0xff] %v1871
        %1954 = vst [vmem:[%s507 + $0x208] sm:$0xff] %v1876
        %1955 = vst [vmem:[%s507 + $0x210] sm:$0xff] %v1881
        %1956 = vst [vmem:[%s507 + $0x218] sm:$0xf] %v1886
        %s1957 = sand.u32 %s150, 1
        %s1958 = sand.u32 %s150, 1
        %s1959 = smul.addr %s1958, 544
        %s1960 = scalar_lea.vmem [#allocation3], %s1959
        // Predicated region
        $region79: #{fused_double_conv_transpose.1} parent=73 // pred_check
          %p1961 = pneg %p160
        $region80: #{fused_double_conv_transpose.1} parent=73 // pred_check_branch
          %1963 = sbr.rel (%p1961) target = $region82
        $region81: #{fused_double_conv_transpose.1} parent=73 // pred_region
          %s1964 = smul.addr %s20, 136
          %s1965 = sadd.s32 %s21, %s1964
          %s1966 = smul.addr %s1965, 8
          %s1967 = scalar_lea.vmem %s5, %s1966
          // Predicated region
          $region83: #{fused_double_conv_transpose.1} parent=81 // pred_check
            _
          $region84: #{fused_double_conv_transpose.1} parent=81 // pred_check_branch
            %1969 = sbr.rel (0) target = $region86
          $region85: #{fused_double_conv_transpose.1} parent=81 // pred_region
            // Predicated region
            $region87: #{fused_double_conv_transpose.1} parent=85 // pred_check
              _
            $region88: #{fused_double_conv_transpose.1} parent=85 // pred_check_branch
              %1971 = sbr.rel (0) target = $region90
            $region89: #{fused_double_conv_transpose.1} parent=85 // pred_region
              // Predicated region
              $region102: #{fused_double_conv_transpose.1} parent=89 // pred_check
                _
              $region103: #{fused_double_conv_transpose.1} parent=89 // pred_check_branch
                %2121 = sbr.rel (0) target = $region105
              $region104: #{fused_double_conv_transpose.1} parent=89 // pred_region
                loop: start=0, step=1, limit=1
                $region106: #{fused_double_conv_transpose.1} parent=104 // loop_pre_header
                  _
                $region107: #{fused_double_conv_transpose.1} parent=104 // loop_header
                  %s2123 = sphi 0, %s2127
                  %p2124 = scmp.ge.s32.totalorder %s2123, 1
                  %s2128 = sphi %s1960, %s1960
                  %s2129 = sphi %s1967, %s1967
                $region108: #{fused_double_conv_transpose.1} parent=104 // loop_header_branch
                  %2126 = sbr.rel (%p2124) target = $region112
                $region109: #{fused_double_conv_transpose.1} parent=104 // loop_body
                  %v2130 = vld [vmem:[%s2128] sm:$0xff]
                  %2131 = vst [vmem:[%s2129] sm:$0xff] %v2130
                  %v2132 = vld [vmem:[%s2128 + $0x8] sm:$0xff]
                  %2133 = vst [vmem:[%s2129 + $0x10] sm:$0xff] %v2132
                  %v2134 = vld [vmem:[%s2128 + $0x10] sm:$0xff]
                  %2135 = vst [vmem:[%s2129 + $0x20] sm:$0xff] %v2134
                  %v2136 = vld [vmem:[%s2128 + $0x18] sm:$0xff]
                  %2137 = vst [vmem:[%s2129 + $0x30] sm:$0xff] %v2136
                  %v2138 = vld [vmem:[%s2128 + $0x20] sm:$0xff]
                  %2139 = vst [vmem:[%s2129 + $0x40] sm:$0xff] %v2138
                  %v2140 = vld [vmem:[%s2128 + $0x28] sm:$0xff]
                  %2141 = vst [vmem:[%s2129 + $0x50] sm:$0xff] %v2140
                  %v2142 = vld [vmem:[%s2128 + $0x30] sm:$0xff]
                  %2143 = vst [vmem:[%s2129 + $0x60] sm:$0xff] %v2142
                  %v2144 = vld [vmem:[%s2128 + $0x38] sm:$0xff]
                  %2145 = vst [vmem:[%s2129 + $0x70] sm:$0xff] %v2144
                  %v2146 = vld [vmem:[%s2128 + $0x40] sm:$0xff]
                  %2147 = vst [vmem:[%s2129 + $0x80] sm:$0xff] %v2146
                  %v2148 = vld [vmem:[%s2128 + $0x48] sm:$0xff]
                  %2149 = vst [vmem:[%s2129 + $0x90] sm:$0xff] %v2148
                  %v2150 = vld [vmem:[%s2128 + $0x50] sm:$0xff]
                  %2151 = vst [vmem:[%s2129 + $0xa0] sm:$0xff] %v2150
                  %v2152 = vld [vmem:[%s2128 + $0x58] sm:$0xff]
                  %2153 = vst [vmem:[%s2129 + $0xb0] sm:$0xff] %v2152
                  %v2154 = vld [vmem:[%s2128 + $0x60] sm:$0xff]
                  %2155 = vst [vmem:[%s2129 + $0xc0] sm:$0xff] %v2154
                  %v2156 = vld [vmem:[%s2128 + $0x68] sm:$0xff]
                  %2157 = vst [vmem:[%s2129 + $0xd0] sm:$0xff] %v2156
                  %v2158 = vld [vmem:[%s2128 + $0x70] sm:$0xff]
                  %2159 = vst [vmem:[%s2129 + $0xe0] sm:$0xff] %v2158
                  %v2160 = vld [vmem:[%s2128 + $0x78] sm:$0xff]
                  %2161 = vst [vmem:[%s2129 + $0xf0] sm:$0xff] %v2160
                  %v2162 = vld [vmem:[%s2128 + $0x80] sm:$0xff]
                  %2163 = vst [vmem:[%s2129 + $0x100] sm:$0xff] %v2162
                  %v2164 = vld [vmem:[%s2128 + $0x88] sm:$0xff]
                  %2165 = vst [vmem:[%s2129 + $0x110] sm:$0xff] %v2164
                  %v2166 = vld [vmem:[%s2128 + $0x90] sm:$0xff]
                  %2167 = vst [vmem:[%s2129 + $0x120] sm:$0xff] %v2166
                  %v2168 = vld [vmem:[%s2128 + $0x98] sm:$0xff]
                  %2169 = vst [vmem:[%s2129 + $0x130] sm:$0xff] %v2168
                  %v2170 = vld [vmem:[%s2128 + $0xa0] sm:$0xff]
                  %2171 = vst [vmem:[%s2129 + $0x140] sm:$0xff] %v2170
                  %v2172 = vld [vmem:[%s2128 + $0xa8] sm:$0xff]
                  %2173 = vst [vmem:[%s2129 + $0x150] sm:$0xff] %v2172
                  %v2174 = vld [vmem:[%s2128 + $0xb0] sm:$0xff]
                  %2175 = vst [vmem:[%s2129 + $0x160] sm:$0xff] %v2174
                  %v2176 = vld [vmem:[%s2128 + $0xb8] sm:$0xff]
                  %2177 = vst [vmem:[%s2129 + $0x170] sm:$0xff] %v2176
                  %v2178 = vld [vmem:[%s2128 + $0xc0] sm:$0xff]
                  %2179 = vst [vmem:[%s2129 + $0x180] sm:$0xff] %v2178
                  %v2180 = vld [vmem:[%s2128 + $0xc8] sm:$0xff]
                  %2181 = vst [vmem:[%s2129 + $0x190] sm:$0xff] %v2180
                  %v2182 = vld [vmem:[%s2128 + $0xd0] sm:$0xff]
                  %2183 = vst [vmem:[%s2129 + $0x1a0] sm:$0xff] %v2182
                  %v2184 = vld [vmem:[%s2128 + $0xd8] sm:$0xff]
                  %2185 = vst [vmem:[%s2129 + $0x1b0] sm:$0xff] %v2184
                  %v2186 = vld [vmem:[%s2128 + $0xe0] sm:$0xff]
                  %2187 = vst [vmem:[%s2129 + $0x1c0] sm:$0xff] %v2186
                  %v2188 = vld [vmem:[%s2128 + $0xe8] sm:$0xff]
                  %2189 = vst [vmem:[%s2129 + $0x1d0] sm:$0xff] %v2188
                  %v2190 = vld [vmem:[%s2128 + $0xf0] sm:$0xff]
                  %2191 = vst [vmem:[%s2129 + $0x1e0] sm:$0xff] %v2190
                  %v2192 = vld [vmem:[%s2128 + $0xf8] sm:$0xff]
                  %2193 = vst [vmem:[%s2129 + $0x1f0] sm:$0xff] %v2192
                  %v2194 = vld [vmem:[%s2128 + $0x100] sm:$0xff]
                  %2195 = vst [vmem:[%s2129 + $0x200] sm:$0xff] %v2194
                  %v2196 = vld [vmem:[%s2128 + $0x108] sm:$0xff]
                  %2197 = vst [vmem:[%s2129 + $0x210] sm:$0xff] %v2196
                  %v2198 = vld [vmem:[%s2128 + $0x110] sm:$0xff]
                  %2199 = vst [vmem:[%s2129 + $0x220] sm:$0xff] %v2198
                  %v2200 = vld [vmem:[%s2128 + $0x118] sm:$0xff]
                  %2201 = vst [vmem:[%s2129 + $0x230] sm:$0xff] %v2200
                  %v2202 = vld [vmem:[%s2128 + $0x120] sm:$0xff]
                  %2203 = vst [vmem:[%s2129 + $0x240] sm:$0xff] %v2202
                  %v2204 = vld [vmem:[%s2128 + $0x128] sm:$0xff]
                  %2205 = vst [vmem:[%s2129 + $0x250] sm:$0xff] %v2204
                  %v2206 = vld [vmem:[%s2128 + $0x130] sm:$0xff]
                  %2207 = vst [vmem:[%s2129 + $0x260] sm:$0xff] %v2206
                  %v2208 = vld [vmem:[%s2128 + $0x138] sm:$0xff]
                  %2209 = vst [vmem:[%s2129 + $0x270] sm:$0xff] %v2208
                  %v2210 = vld [vmem:[%s2128 + $0x140] sm:$0xff]
                  %2211 = vst [vmem:[%s2129 + $0x280] sm:$0xff] %v2210
                  %v2212 = vld [vmem:[%s2128 + $0x148] sm:$0xff]
                  %2213 = vst [vmem:[%s2129 + $0x290] sm:$0xff] %v2212
                  %v2214 = vld [vmem:[%s2128 + $0x150] sm:$0xff]
                  %2215 = vst [vmem:[%s2129 + $0x2a0] sm:$0xff] %v2214
                  %v2216 = vld [vmem:[%s2128 + $0x158] sm:$0xff]
                  %2217 = vst [vmem:[%s2129 + $0x2b0] sm:$0xff] %v2216
                  %v2218 = vld [vmem:[%s2128 + $0x160] sm:$0xff]
                  %2219 = vst [vmem:[%s2129 + $0x2c0] sm:$0xff] %v2218
                  %v2220 = vld [vmem:[%s2128 + $0x168] sm:$0xff]
                  %2221 = vst [vmem:[%s2129 + $0x2d0] sm:$0xff] %v2220
                  %v2222 = vld [vmem:[%s2128 + $0x170] sm:$0xff]
                  %2223 = vst [vmem:[%s2129 + $0x2e0] sm:$0xff] %v2222
                  %v2224 = vld [vmem:[%s2128 + $0x178] sm:$0xff]
                  %2225 = vst [vmem:[%s2129 + $0x2f0] sm:$0xff] %v2224
                  %v2226 = vld [vmem:[%s2128 + $0x180] sm:$0xff]
                  %2227 = vst [vmem:[%s2129 + $0x300] sm:$0xff] %v2226
                  %v2228 = vld [vmem:[%s2128 + $0x188] sm:$0xff]
                  %2229 = vst [vmem:[%s2129 + $0x310] sm:$0xff] %v2228
                  %v2230 = vld [vmem:[%s2128 + $0x190] sm:$0xff]
                  %2231 = vst [vmem:[%s2129 + $0x320] sm:$0xff] %v2230
                  %v2232 = vld [vmem:[%s2128 + $0x198] sm:$0xff]
                  %2233 = vst [vmem:[%s2129 + $0x330] sm:$0xff] %v2232
                  %v2234 = vld [vmem:[%s2128 + $0x1a0] sm:$0xff]
                  %2235 = vst [vmem:[%s2129 + $0x340] sm:$0xff] %v2234
                  %v2236 = vld [vmem:[%s2128 + $0x1a8] sm:$0xff]
                  %2237 = vst [vmem:[%s2129 + $0x350] sm:$0xff] %v2236
                  %v2238 = vld [vmem:[%s2128 + $0x1b0] sm:$0xff]
                  %2239 = vst [vmem:[%s2129 + $0x360] sm:$0xff] %v2238
                  %v2240 = vld [vmem:[%s2128 + $0x1b8] sm:$0xff]
                  %2241 = vst [vmem:[%s2129 + $0x370] sm:$0xff] %v2240
                  %v2242 = vld [vmem:[%s2128 + $0x1c0] sm:$0xff]
                  %2243 = vst [vmem:[%s2129 + $0x380] sm:$0xff] %v2242
                  %v2244 = vld [vmem:[%s2128 + $0x1c8] sm:$0xff]
                  %2245 = vst [vmem:[%s2129 + $0x390] sm:$0xff] %v2244
                  %v2246 = vld [vmem:[%s2128 + $0x1d0] sm:$0xff]
                  %2247 = vst [vmem:[%s2129 + $0x3a0] sm:$0xff] %v2246
                  %v2248 = vld [vmem:[%s2128 + $0x1d8] sm:$0xff]
                  %2249 = vst [vmem:[%s2129 + $0x3b0] sm:$0xff] %v2248
                  %v2250 = vld [vmem:[%s2128 + $0x1e0] sm:$0xff]
                  %2251 = vst [vmem:[%s2129 + $0x3c0] sm:$0xff] %v2250
                  %v2252 = vld [vmem:[%s2128 + $0x1e8] sm:$0xff]
                  %2253 = vst [vmem:[%s2129 + $0x3d0] sm:$0xff] %v2252
                  %v2254 = vld [vmem:[%s2128 + $0x1f0] sm:$0xff]
                  %2255 = vst [vmem:[%s2129 + $0x3e0] sm:$0xff] %v2254
                  %v2256 = vld [vmem:[%s2128 + $0x1f8] sm:$0xff]
                  %2257 = vst [vmem:[%s2129 + $0x3f0] sm:$0xff] %v2256
                  %v2258 = vld [vmem:[%s2128 + $0x200] sm:$0xff]
                  %2259 = vst [vmem:[%s2129 + $0x400] sm:$0xff] %v2258
                  %v2260 = vld [vmem:[%s2128 + $0x208] sm:$0xff]
                  %2261 = vst [vmem:[%s2129 + $0x410] sm:$0xff] %v2260
                  %v2262 = vld [vmem:[%s2128 + $0x210] sm:$0xff]
                  %2263 = vst [vmem:[%s2129 + $0x420] sm:$0xff] %v2262
                  %v2264 = vld [vmem:[%s2128 + $0x218] sm:$0xff]
                  %2265 = vst [vmem:[%s2129 + $0x430] sm:$0xff] %v2264
                $region110: #{fused_double_conv_transpose.1} parent=104 // loop_footer
                  %s2127 = sadd.s32 1, %s2123
                $region111: #{fused_double_conv_transpose.1} parent=104 // loop_footer_branch
                  %2122 = sbr.rel target = $region107
                $region112: #{fused_double_conv_transpose.1} parent=104 // loop_exit
                  _
              $region105: #{fused_double_conv_transpose.1} parent=89 // pred_fallthru
                _
              // Predicated region
              $region113: #{fused_double_conv_transpose.1} parent=89 // pred_check
                _
              $region114: #{fused_double_conv_transpose.1} parent=89 // pred_check_branch
                %2267 = sbr.rel target = $region116
              $region115: #{fused_double_conv_transpose.1} parent=89 // pred_region
                _
              $region116: #{fused_double_conv_transpose.1} parent=89 // pred_fallthru
                _
            $region90: #{fused_double_conv_transpose.1} parent=85 // pred_fallthru
              _
            // Predicated region
            $region91: #{fused_double_conv_transpose.1} parent=85 // pred_check
              _
            $region92: #{fused_double_conv_transpose.1} parent=85 // pred_check_branch
              %1973 = sbr.rel target = $region94
            $region93: #{fused_double_conv_transpose.1} parent=85 // pred_region
              %s1975 = ssub.s32 256, 1
              loop: start=0, step=1, limit=1
              $region95: #{fused_double_conv_transpose.1} parent=93 // loop_pre_header
                _
              $region96: #{fused_double_conv_transpose.1} parent=93 // loop_header
                %s1977 = sphi 0, %s1981
                %p1978 = scmp.ge.s32.totalorder %s1977, 1
                %s1982 = sphi %s1960, %s1960
                %s1983 = sphi %s1967, %s1967
              $region97: #{fused_double_conv_transpose.1} parent=93 // loop_header_branch
                %1980 = sbr.rel (%p1978) target = $region101
              $region98: #{fused_double_conv_transpose.1} parent=93 // loop_body
                %v1984 = vld [vmem:[%s1982] sm:%s1975]
                %1985 = vst [vmem:[%s1983] sm:%s1975] %v1984
                %v1986 = vld [vmem:[%s1982 + $0x8] sm:%s1975]
                %1987 = vst [vmem:[%s1983 + $0x10] sm:%s1975] %v1986
                %v1988 = vld [vmem:[%s1982 + $0x10] sm:%s1975]
                %1989 = vst [vmem:[%s1983 + $0x20] sm:%s1975] %v1988
                %v1990 = vld [vmem:[%s1982 + $0x18] sm:%s1975]
                %1991 = vst [vmem:[%s1983 + $0x30] sm:%s1975] %v1990
                %v1992 = vld [vmem:[%s1982 + $0x20] sm:%s1975]
                %1993 = vst [vmem:[%s1983 + $0x40] sm:%s1975] %v1992
                %v1994 = vld [vmem:[%s1982 + $0x28] sm:%s1975]
                %1995 = vst [vmem:[%s1983 + $0x50] sm:%s1975] %v1994
                %v1996 = vld [vmem:[%s1982 + $0x30] sm:%s1975]
                %1997 = vst [vmem:[%s1983 + $0x60] sm:%s1975] %v1996
                %v1998 = vld [vmem:[%s1982 + $0x38] sm:%s1975]
                %1999 = vst [vmem:[%s1983 + $0x70] sm:%s1975] %v1998
                %v2000 = vld [vmem:[%s1982 + $0x40] sm:%s1975]
                %2001 = vst [vmem:[%s1983 + $0x80] sm:%s1975] %v2000
                %v2002 = vld [vmem:[%s1982 + $0x48] sm:%s1975]
                %2003 = vst [vmem:[%s1983 + $0x90] sm:%s1975] %v2002
                %v2004 = vld [vmem:[%s1982 + $0x50] sm:%s1975]
                %2005 = vst [vmem:[%s1983 + $0xa0] sm:%s1975] %v2004
                %v2006 = vld [vmem:[%s1982 + $0x58] sm:%s1975]
                %2007 = vst [vmem:[%s1983 + $0xb0] sm:%s1975] %v2006
                %v2008 = vld [vmem:[%s1982 + $0x60] sm:%s1975]
                %2009 = vst [vmem:[%s1983 + $0xc0] sm:%s1975] %v2008
                %v2010 = vld [vmem:[%s1982 + $0x68] sm:%s1975]
                %2011 = vst [vmem:[%s1983 + $0xd0] sm:%s1975] %v2010
                %v2012 = vld [vmem:[%s1982 + $0x70] sm:%s1975]
                %2013 = vst [vmem:[%s1983 + $0xe0] sm:%s1975] %v2012
                %v2014 = vld [vmem:[%s1982 + $0x78] sm:%s1975]
                %2015 = vst [vmem:[%s1983 + $0xf0] sm:%s1975] %v2014
                %v2016 = vld [vmem:[%s1982 + $0x80] sm:%s1975]
                %2017 = vst [vmem:[%s1983 + $0x100] sm:%s1975] %v2016
                %v2018 = vld [vmem:[%s1982 + $0x88] sm:%s1975]
                %2019 = vst [vmem:[%s1983 + $0x110] sm:%s1975] %v2018
                %v2020 = vld [vmem:[%s1982 + $0x90] sm:%s1975]
                %2021 = vst [vmem:[%s1983 + $0x120] sm:%s1975] %v2020
                %v2022 = vld [vmem:[%s1982 + $0x98] sm:%s1975]
                %2023 = vst [vmem:[%s1983 + $0x130] sm:%s1975] %v2022
                %v2024 = vld [vmem:[%s1982 + $0xa0] sm:%s1975]
                %2025 = vst [vmem:[%s1983 + $0x140] sm:%s1975] %v2024
                %v2026 = vld [vmem:[%s1982 + $0xa8] sm:%s1975]
                %2027 = vst [vmem:[%s1983 + $0x150] sm:%s1975] %v2026
                %v2028 = vld [vmem:[%s1982 + $0xb0] sm:%s1975]
                %2029 = vst [vmem:[%s1983 + $0x160] sm:%s1975] %v2028
                %v2030 = vld [vmem:[%s1982 + $0xb8] sm:%s1975]
                %2031 = vst [vmem:[%s1983 + $0x170] sm:%s1975] %v2030
                %v2032 = vld [vmem:[%s1982 + $0xc0] sm:%s1975]
                %2033 = vst [vmem:[%s1983 + $0x180] sm:%s1975] %v2032
                %v2034 = vld [vmem:[%s1982 + $0xc8] sm:%s1975]
                %2035 = vst [vmem:[%s1983 + $0x190] sm:%s1975] %v2034
                %v2036 = vld [vmem:[%s1982 + $0xd0] sm:%s1975]
                %2037 = vst [vmem:[%s1983 + $0x1a0] sm:%s1975] %v2036
                %v2038 = vld [vmem:[%s1982 + $0xd8] sm:%s1975]
                %2039 = vst [vmem:[%s1983 + $0x1b0] sm:%s1975] %v2038
                %v2040 = vld [vmem:[%s1982 + $0xe0] sm:%s1975]
                %2041 = vst [vmem:[%s1983 + $0x1c0] sm:%s1975] %v2040
                %v2042 = vld [vmem:[%s1982 + $0xe8] sm:%s1975]
                %2043 = vst [vmem:[%s1983 + $0x1d0] sm:%s1975] %v2042
                %v2044 = vld [vmem:[%s1982 + $0xf0] sm:%s1975]
                %2045 = vst [vmem:[%s1983 + $0x1e0] sm:%s1975] %v2044
                %v2046 = vld [vmem:[%s1982 + $0xf8] sm:%s1975]
                %2047 = vst [vmem:[%s1983 + $0x1f0] sm:%s1975] %v2046
                %v2048 = vld [vmem:[%s1982 + $0x100] sm:%s1975]
                %2049 = vst [vmem:[%s1983 + $0x200] sm:%s1975] %v2048
                %v2050 = vld [vmem:[%s1982 + $0x108] sm:%s1975]
                %2051 = vst [vmem:[%s1983 + $0x210] sm:%s1975] %v2050
                %v2052 = vld [vmem:[%s1982 + $0x110] sm:%s1975]
                %2053 = vst [vmem:[%s1983 + $0x220] sm:%s1975] %v2052
                %v2054 = vld [vmem:[%s1982 + $0x118] sm:%s1975]
                %2055 = vst [vmem:[%s1983 + $0x230] sm:%s1975] %v2054
                %v2056 = vld [vmem:[%s1982 + $0x120] sm:%s1975]
                %2057 = vst [vmem:[%s1983 + $0x240] sm:%s1975] %v2056
                %v2058 = vld [vmem:[%s1982 + $0x128] sm:%s1975]
                %2059 = vst [vmem:[%s1983 + $0x250] sm:%s1975] %v2058
                %v2060 = vld [vmem:[%s1982 + $0x130] sm:%s1975]
                %2061 = vst [vmem:[%s1983 + $0x260] sm:%s1975] %v2060
                %v2062 = vld [vmem:[%s1982 + $0x138] sm:%s1975]
                %2063 = vst [vmem:[%s1983 + $0x270] sm:%s1975] %v2062
                %v2064 = vld [vmem:[%s1982 + $0x140] sm:%s1975]
                %2065 = vst [vmem:[%s1983 + $0x280] sm:%s1975] %v2064
                %v2066 = vld [vmem:[%s1982 + $0x148] sm:%s1975]
                %2067 = vst [vmem:[%s1983 + $0x290] sm:%s1975] %v2066
                %v2068 = vld [vmem:[%s1982 + $0x150] sm:%s1975]
                %2069 = vst [vmem:[%s1983 + $0x2a0] sm:%s1975] %v2068
                %v2070 = vld [vmem:[%s1982 + $0x158] sm:%s1975]
                %2071 = vst [vmem:[%s1983 + $0x2b0] sm:%s1975] %v2070
                %v2072 = vld [vmem:[%s1982 + $0x160] sm:%s1975]
                %2073 = vst [vmem:[%s1983 + $0x2c0] sm:%s1975] %v2072
                %v2074 = vld [vmem:[%s1982 + $0x168] sm:%s1975]
                %2075 = vst [vmem:[%s1983 + $0x2d0] sm:%s1975] %v2074
                %v2076 = vld [vmem:[%s1982 + $0x170] sm:%s1975]
                %2077 = vst [vmem:[%s1983 + $0x2e0] sm:%s1975] %v2076
                %v2078 = vld [vmem:[%s1982 + $0x178] sm:%s1975]
                %2079 = vst [vmem:[%s1983 + $0x2f0] sm:%s1975] %v2078
                %v2080 = vld [vmem:[%s1982 + $0x180] sm:%s1975]
                %2081 = vst [vmem:[%s1983 + $0x300] sm:%s1975] %v2080
                %v2082 = vld [vmem:[%s1982 + $0x188] sm:%s1975]
                %2083 = vst [vmem:[%s1983 + $0x310] sm:%s1975] %v2082
                %v2084 = vld [vmem:[%s1982 + $0x190] sm:%s1975]
                %2085 = vst [vmem:[%s1983 + $0x320] sm:%s1975] %v2084
                %v2086 = vld [vmem:[%s1982 + $0x198] sm:%s1975]
                %2087 = vst [vmem:[%s1983 + $0x330] sm:%s1975] %v2086
                %v2088 = vld [vmem:[%s1982 + $0x1a0] sm:%s1975]
                %2089 = vst [vmem:[%s1983 + $0x340] sm:%s1975] %v2088
                %v2090 = vld [vmem:[%s1982 + $0x1a8] sm:%s1975]
                %2091 = vst [vmem:[%s1983 + $0x350] sm:%s1975] %v2090
                %v2092 = vld [vmem:[%s1982 + $0x1b0] sm:%s1975]
                %2093 = vst [vmem:[%s1983 + $0x360] sm:%s1975] %v2092
                %v2094 = vld [vmem:[%s1982 + $0x1b8] sm:%s1975]
                %2095 = vst [vmem:[%s1983 + $0x370] sm:%s1975] %v2094
                %v2096 = vld [vmem:[%s1982 + $0x1c0] sm:%s1975]
                %2097 = vst [vmem:[%s1983 + $0x380] sm:%s1975] %v2096
                %v2098 = vld [vmem:[%s1982 + $0x1c8] sm:%s1975]
                %2099 = vst [vmem:[%s1983 + $0x390] sm:%s1975] %v2098
                %v2100 = vld [vmem:[%s1982 + $0x1d0] sm:%s1975]
                %2101 = vst [vmem:[%s1983 + $0x3a0] sm:%s1975] %v2100
                %v2102 = vld [vmem:[%s1982 + $0x1d8] sm:%s1975]
                %2103 = vst [vmem:[%s1983 + $0x3b0] sm:%s1975] %v2102
                %v2104 = vld [vmem:[%s1982 + $0x1e0] sm:%s1975]
                %2105 = vst [vmem:[%s1983 + $0x3c0] sm:%s1975] %v2104
                %v2106 = vld [vmem:[%s1982 + $0x1e8] sm:%s1975]
                %2107 = vst [vmem:[%s1983 + $0x3d0] sm:%s1975] %v2106
                %v2108 = vld [vmem:[%s1982 + $0x1f0] sm:%s1975]
                %2109 = vst [vmem:[%s1983 + $0x3e0] sm:%s1975] %v2108
                %v2110 = vld [vmem:[%s1982 + $0x1f8] sm:%s1975]
                %2111 = vst [vmem:[%s1983 + $0x3f0] sm:%s1975] %v2110
                %v2112 = vld [vmem:[%s1982 + $0x200] sm:%s1975]
                %2113 = vst [vmem:[%s1983 + $0x400] sm:%s1975] %v2112
                %v2114 = vld [vmem:[%s1982 + $0x208] sm:%s1975]
                %2115 = vst [vmem:[%s1983 + $0x410] sm:%s1975] %v2114
                %v2116 = vld [vmem:[%s1982 + $0x210] sm:%s1975]
                %2117 = vst [vmem:[%s1983 + $0x420] sm:%s1975] %v2116
                %v2118 = vld [vmem:[%s1982 + $0x218] sm:%s1975]
                %2119 = vst [vmem:[%s1983 + $0x430] sm:%s1975] %v2118
              $region99: #{fused_double_conv_transpose.1} parent=93 // loop_footer
                %s1981 = sadd.s32 1, %s1977
              $region100: #{fused_double_conv_transpose.1} parent=93 // loop_footer_branch
                %1976 = sbr.rel target = $region96
              $region101: #{fused_double_conv_transpose.1} parent=93 // loop_exit
                _
            $region94: #{fused_double_conv_transpose.1} parent=85 // pred_fallthru
              _
          $region86: #{fused_double_conv_transpose.1} parent=81 // pred_fallthru
            _
          %2268 = vnop
        $region82: #{fused_double_conv_transpose.1} parent=73 // pred_fallthru
          _
      $region74: #{fused_double_conv_transpose.1} parent=5 // pred_fallthru
        _
      %p2269 = scmp.le.s32.totalorder 2, %s11
      // Predicated region
      $region117: #{fused_double_conv_transpose.1} parent=5 // pred_check
        %p2270 = pneg %p2269
      $region118: #{fused_double_conv_transpose.1} parent=5 // pred_check_branch
        %2272 = sbr.rel (%p2270) target = $region120
      $region119: #{fused_double_conv_transpose.1} parent=5 // pred_region
        %s2273 = ssub.s32 %s11, 2
        // Predicated region
        $region121: #{fused_double_conv_transpose.1} parent=119 // pred_check
          %p2274 = pneg %p166
        $region122: #{fused_double_conv_transpose.1} parent=119 // pred_check_branch
          %2276 = sbr.rel (%p2274) target = $region124
        $region123: #{fused_double_conv_transpose.1} parent=119 // pred_region
          %s2277 = sand.u32 %s151, 1
          %s2278 = sand.u32 %s151, 1
          %s2279 = smul.addr %s2278, 544
          %s2280 = scalar_lea.vmem [#allocation3], %s2279
        $region124: #{fused_double_conv_transpose.1} parent=119 // pred_fallthru
          _
      $region120: #{fused_double_conv_transpose.1} parent=5 // pred_fallthru
        _
    $region6: #{fused_double_conv_transpose.1} parent=1 // loop_footer
      %s15 = sadd.s32 1, %s11
    $region7: #{fused_double_conv_transpose.1} parent=1 // loop_footer_branch
      %10 = sbr.rel target = $region3
    $region8: #{fused_double_conv_transpose.1} parent=1 // loop_exit
      _

</llo_original>
